<compile_context>
chip_gen: v7x
topology: tpu7x:2x2x1
jax: 0.10.0
libtpu: 0.0.40
codegen_flags: <defaults>
</compile_context>

<pallas_src>
from functools import partial

import numpy as np
import jax
import jax.numpy as jnp
from jax import lax
from jax.experimental import pallas as pl
from jax.experimental.pallas import tpu as pltpu

K = 5  # hparams.kernel_size; with 28x28 inputs this yields the 16*4*4 flatten of the spec.


# ------------------------------ fused Pallas kernel ------------------------------

def _fused_forward_kernel(x_ref, a1_ref, b1_ref, a2_ref, b2_ref,
                          f1w_ref, f1b_ref, f2w_ref, f2b_ref, f3w_ref, f3b_ref,
                          o_ref):
    """conv1+relu+pool -> conv2+relu+pool -> fc1+relu -> fc2+relu -> fc3 -> sigmoid,
    fully fused for one batch tile.  Every intermediate stays on-chip."""
    tb = x_ref.shape[0]

    def conv_relu_pool(h, a_ref, b_ref, h_out, half):
        # Valid KxK conv lowered to K per-tap-row GEMMs on lane-dense (rows, W*C)
        # slabs: output row ho gets contributions from input rows ho..ho+K-1.
        # Output columns were pre-ordered [even wo | odd wo] (channel minor), so the
        # 2x2 max-pool along W is a single lane-slice max; H pool is a pairwise max.
        wc_in = h.shape[-1]
        acc = None
        for di in range(K):
            rows = h[:, di:di + h_out, :].reshape(tb * h_out, wc_in)
            z = jnp.dot(rows, a_ref[di], preferred_element_type=jnp.float32)
            acc = z if acc is None else acc + z
        acc = jnp.maximum(acc + b_ref[...], 0.0)                         # bias + relu
        pooled_w = jnp.maximum(acc[:, :half], acc[:, half:])             # pool along W
        pooled = jnp.max(pooled_w.reshape(tb, h_out // 2, 2, half), axis=2)  # pool along H
        return pooled.astype(jnp.bfloat16)

    h = conv_relu_pool(x_ref[...], a1_ref, b1_ref, 24, 72)   # (tb, 12, 72)  == 12x12x6
    h = conv_relu_pool(h,          a2_ref, b2_ref,  8, 64)   # (tb,  4, 64)  ==  4x4x16

    # Row-major reshape is exactly the (y, x, c) order the fc1 weights were permuted to.
    flat = h.reshape(tb, 256)

    z = jnp.dot(flat, f1w_ref[...], preferred_element_type=jnp.float32) + f1b_ref[...]
    z = jnp.maximum(z, 0.0).astype(jnp.bfloat16)
    z = jnp.dot(z, f2w_ref[...], preferred_element_type=jnp.float32) + f2b_ref[...]
    z = jnp.maximum(z, 0.0).astype(jnp.bfloat16)
    z = jnp.dot(z, f3w_ref[...], preferred_element_type=jnp.float32) + f3b_ref[...]

    # Numerically stable sigmoid; columns 10..127 are padding and are sliced off outside.
    pos = z >= 0.0
    ez = jnp.exp(jnp.where(pos, -z, z))          # exp of a non-positive number: no overflow
    o_ref[...] = jnp.where(pos, 1.0 / (1.0 + ez), ez / (1.0 + ez))


def _pallas_forward(x, pp, tb):
    Bp = x.shape[0]
    names = ("a1", "b1", "a2", "b2", "f1w", "f1b", "f2w", "f2b", "f3w", "f3b")
    weights = [pp[n] for n in names]

    def bcast(a):
        # Grid-invariant (weight) block: whole array, same block every step.
        return pl.BlockSpec(a.shape, lambda i, _nd=a.ndim: (0,) * _nd)

    return pl.pallas_call(
        _fused_forward_kernel,
        out_shape=jax.ShapeDtypeStruct((Bp, 128), jnp.float32),
        grid=(Bp // tb,),
        in_specs=[pl.BlockSpec((tb, 28, 28), lambda i: (i, 0, 0))]
                 + [bcast(w) for w in weights],
        out_specs=pl.BlockSpec((tb, 128), lambda i: (i, 0)),
        compiler_params=pltpu.CompilerParams(
            dimension_semantics=("parallel",),      # v7x: split batch over 2 TCs; free elsewhere
            vmem_limit_bytes=48 * 1024 * 1024,      # safe on v7x (64 MiB phys), above v5e default
        ),
    )(x, *weights)


# ------------------------------ public forward (jit) ------------------------------

def _round_up(x, m):
    return ((x + m - 1) // m) * m


def _choose_batch_tile(B, batch_tile):
    """Multiple of 8 when B > 8; guarantee >=2 grid steps so v7x uses both TCs."""
    if B <= 8:
        return B
    half = -(-B // 2)                                   # ceil(B/2)
    return max(8, min(_round_up(batch_tile, 8), _round_up(half, 8)))


@partial(jax.jit, static_argnames=("batch_tile",))
def conditional_conv_discriminator(x_nchw, prepped_params, batch_tile=64):
    """Forward pass.  x_nchw: (B, 1, 28, 28) float32 -> (B, 10) float32."""
    B = x_nchw.shape[0]
    # conv1 has a single input channel, so NCHW (B,1,28,28) == (B,28,28): free reshape.
    # Cast to bf16 once: halves input DMA and feeds the MXU its native dtype.
    x = x_nchw.astype(jnp.bfloat16).reshape(B, 28, 28)

    tb = _choose_batch_tile(B, batch_tile)
    pad = (-B) % tb
    if pad:
        x = jnp.pad(x, ((0, pad), (0, 0), (0, 0)))

    out = _pallas_forward(x, prepped_params, tb)        # (B + pad, 128), lane-dense store
    return out[:B, :10]


# ----------------------- one-time parameter re-layout -----------------------

def prepare_params(p):
    """Re-lay-out PyTorch-convention parameters once so the forward pass needs no
    per-call transposes:
      * conv weights -> K per-tap-row matrices (W_in*Cin, W_out*Cout) with output
        columns ordered [even wo | odd wo] (channel minor) so the W max-pool is a
        lane-slice max,
      * fc1 permuted to the in-kernel (y, x, c) flatten order,
      * fc2 pre-transposed, fc3 pre-transposed and zero-padded to 128 output columns,
      * GEMM weights in bf16, biases in f32."""
    np_p = {k: np.asarray(v, np.float32) for k, v in p.items()}
    w1, b1 = np_p["conv1_w"], np_p["conv1_b"]          # (6,1,5,5), (6,)
    w2, b2 = np_p["conv2_w"], np_p["conv2_b"]          # (16,6,5,5), (16,)

    # conv1: 28 input lanes (W, Cin=1) -> 144 output columns (24 wo x 6 co, even/odd split).
    A1 = np.zeros((K, 28, 144), np.float32)
    for di in range(K):
        for wo in range(24):
            base = (0 if wo % 2 == 0 else 72) + (wo // 2) * 6
            for dj in range(K):
                A1[di, wo + dj, base:base + 6] = w1[:, 0, di, dj]
    b1_cols = np.tile(b1, 24).reshape(1, 144)

    # conv2: 72 input lanes (12 w x 6 ci) -> 128 output columns (8 wo x 16 co, even/odd split).
    A2 = np.zeros((K, 72, 128), np.float32)
    for di in range(K):
        for wo in range(8):
            base = (0 if wo % 2 == 0 else 64) + (wo // 2) * 16
            for dj in range(K):
                for ci in range(6):
                    A2[di, (wo + dj) * 6 + ci, base:base + 16] = w2[:, ci, di, dj]
    b2_cols = np.tile(b2, 8).reshape(1, 128)

    # fc1 permuted from PyTorch's (c,y,x) flatten order to the kernel's (y,x,c) order.
    f1 = np_p["fc1_w"].reshape(128, 16, 4, 4).transpose(0, 2, 3, 1).reshape(128, 256).T

    # fc3 zero-padded to 128 output columns for a lane-dense output store.
    f3w = np.zeros((64, 128), np.float32)
    f3w[:, :10] = np_p["fc3_w"].T
    f3b = np.zeros((1, 128), np.float32)
    f3b[0, :10] = np_p["fc3_b"]

    bf, f32 = jnp.bfloat16, jnp.float32
    return {
        "a1": jnp.asarray(A1, bf),  "b1": jnp.asarray(b1_cols, f32),
        "a2": jnp.asarray(A2, bf),  "b2": jnp.asarray(b2_cols, f32),
        "f1w": jnp.asarray(f1, bf), "f1b": jnp.asarray(np_p["fc1_b"].reshape(1, 128), f32),
        "f2w": jnp.asarray(np_p["fc2_w"].T, bf),
        "f2b": jnp.asarray(np_p["fc2_b"].reshape(1, 64), f32),
        "f3w": jnp.asarray(f3w, bf), "f3b": jnp.asarray(f3b, f32),
    }


# ----------------------- deterministic parameter init -----------------------

def init_params(key, kernel_size=5):
    def uinit(k, shape, fan_in):
        bound = 1.0 / np.sqrt(fan_in)
        return jax.random.uniform(k, shape, jnp.float32, -bound, bound)

    ks = jax.random.split(key, 10)
    k = kernel_size
    p = {}
    p["conv1_w"] = uinit(ks[0], (6, 1, k, k), 1 * k * k)
    p["conv1_b"] = uinit(ks[1], (6,), 1 * k * k)
    p["conv2_w"] = uinit(ks[2], (16, 6, k, k), 6 * k * k)
    p["conv2_b"] = uinit(ks[3], (16,), 6 * k * k)
    p["fc1_w"] = uinit(ks[4], (128, 16 * 4 * 4), 16 * 4 * 4)
    p["fc1_b"] = uinit(ks[5], (128,), 16 * 4 * 4)
    p["fc2_w"] = uinit(ks[6], (64, 128), 128)
    p["fc2_b"] = uinit(ks[7], (64,), 128)
    p["fc3_w"] = uinit(ks[8], (10, 64), 64)
    p["fc3_b"] = uinit(ks[9], (10,), 64)
    return p


# ------------------------------ pure-JAX reference ---------------------------

def reference(x_nchw, p):
    dn = ("NCHW", "OIHW", "NCHW")
    y = lax.conv_general_dilated(x_nchw, p["conv1_w"], (1, 1), "VALID",
                                 dimension_numbers=dn) + p["conv1_b"][None, :, None, None]
    y = jnp.maximum(y, 0.0)
    y = lax.reduce_window(y, -jnp.inf, lax.max, (1, 1, 2, 2), (1, 1, 2, 2), "VALID")
    y = lax.conv_general_dilated(y, p["conv2_w"], (1, 1), "VALID",
                                 dimension_numbers=dn) + p["conv2_b"][None, :, None, None]
    y = jnp.maximum(y, 0.0)
    y = lax.reduce_window(y, -jnp.inf, lax.max, (1, 1, 2, 2), (1, 1, 2, 2), "VALID")
    y = y.reshape(y.shape[0], -1)
    y = jnp.maximum(y @ p["fc1_w"].T + p["fc1_b"], 0.0)
    y = jnp.maximum(y @ p["fc2_w"].T + p["fc2_b"], 0.0)
    y = y @ p["fc3_w"].T + p["fc3_b"]
    return jax.nn.sigmoid(y)


if __name__ == "__main__":
    key = jax.random.PRNGKey(0)
    pkey, xkey = jax.random.split(key)
    params = init_params(pkey, kernel_size=K)
    prepped = prepare_params(params)   # one-time weight re-layout

    # Small deterministic input, NCHW like PyTorch: batch=2, 1 channel, 28x28.
    x = jax.random.normal(xkey, (2, 1, 28, 28), dtype=jnp.float32)
    out = jax.block_until_ready(conditional_conv_discriminator(x, prepped))
    ref = jax.block_until_ready(reference(x, params))
    # bf16 GEMM operands -> compare with a bf16-appropriate tolerance (outputs in (0,1)).
    np.testing.assert_allclose(np.asarray(out), np.asarray(ref), rtol=0.0, atol=2e-2)
    assert out.shape == (2, 10) and out.dtype == jnp.float32

    # Also exercise the multi-step tiled path (2 grid steps, tb=16).
    x2 = jax.random.normal(jax.random.PRNGKey(1), (32, 1, 28, 28), dtype=jnp.float32)
    out2 = jax.block_until_ready(conditional_conv_discriminator(x2, prepped))
    ref2 = jax.block_until_ready(reference(x2, params))
    np.testing.assert_allclose(np.asarray(out2), np.asarray(ref2), rtol=0.0, atol=2e-2)
    assert out2.shape == (32, 10)

    print("KERNEL_OK")
</pallas_src>

<mosaic_0001>
module attributes {stable_mosaic.version = 11 : i64} {
  func.func @_fused_forward_kernel(%arg0: i32, %arg1: memref<2x28x28xbf16, #tpu.memory_space<vmem>>, %arg2: memref<5x28x144xbf16, #tpu.memory_space<vmem>>, %arg3: memref<1x144xf32, #tpu.memory_space<vmem>>, %arg4: memref<5x72x128xbf16, #tpu.memory_space<vmem>>, %arg5: memref<1x128xf32, #tpu.memory_space<vmem>>, %arg6: memref<256x128xbf16, #tpu.memory_space<vmem>>, %arg7: memref<1x128xf32, #tpu.memory_space<vmem>>, %arg8: memref<128x64xbf16, #tpu.memory_space<vmem>>, %arg9: memref<1x64xf32, #tpu.memory_space<vmem>>, %arg10: memref<64x128xbf16, #tpu.memory_space<vmem>>, %arg11: memref<1x128xf32, #tpu.memory_space<vmem>>, %arg12: memref<2x128xf32, #tpu.memory_space<vmem>>) attributes {dimension_semantics = [#tpu.dimension_semantics<parallel>], iteration_bounds = array<i64: 1>, scalar_prefetch = 0 : i64, scratch_operands = 0 : i64, tpu.core_type = #tpu.core_type<tc>, window_params = [{transform_indices = @transform_0, window_bounds = array<i64: 2, 28, 28>}, {pipeline_mode = #tpu.pipeline_mode<synchronous>, transform_indices = @transform_1, window_bounds = array<i64: 5, 28, 144>}, {pipeline_mode = #tpu.pipeline_mode<synchronous>, transform_indices = @transform_2, window_bounds = array<i64: 1, 144>}, {pipeline_mode = #tpu.pipeline_mode<synchronous>, transform_indices = @transform_3, window_bounds = array<i64: 5, 72, 128>}, {pipeline_mode = #tpu.pipeline_mode<synchronous>, transform_indices = @transform_4, window_bounds = array<i64: 1, 128>}, {pipeline_mode = #tpu.pipeline_mode<synchronous>, transform_indices = @transform_5, window_bounds = array<i64: 256, 128>}, {pipeline_mode = #tpu.pipeline_mode<synchronous>, transform_indices = @transform_6, window_bounds = array<i64: 1, 128>}, {pipeline_mode = #tpu.pipeline_mode<synchronous>, transform_indices = @transform_7, window_bounds = array<i64: 128, 64>}, {pipeline_mode = #tpu.pipeline_mode<synchronous>, transform_indices = @transform_8, window_bounds = array<i64: 1, 64>}, {pipeline_mode = #tpu.pipeline_mode<synchronous>, transform_indices = @transform_9, window_bounds = array<i64: 64, 128>}, {pipeline_mode = #tpu.pipeline_mode<synchronous>, transform_indices = @transform_10, window_bounds = array<i64: 1, 128>}, {transform_indices = @transform_11, window_bounds = array<i64: 2, 128>}]} {
    %c0 = arith.constant 0 : index
    %c0_0 = arith.constant 0 : index
    %c0_1 = arith.constant 0 : index
    %0 = vector.load %arg1[%c0, %c0_0, %c0_1] : memref<2x28x28xbf16, #tpu.memory_space<vmem>>, vector<2x28x28xbf16>
    %1 = vector.extract_strided_slice %0 {offsets = [0, 0, 0], sizes = [2, 24, 28], strides = [1, 1, 1]} : vector<2x28x28xbf16> to vector<2x24x28xbf16>
    %2 = vector.shape_cast %1 : vector<2x24x28xbf16> to vector<48x28xbf16>
    %c0_2 = arith.constant 0 : index
    %c0_3 = arith.constant 0 : index
    %c0_4 = arith.constant 0 : index
    %3 = vector.load %arg2[%c0_2, %c0_3, %c0_4] : memref<5x28x144xbf16, #tpu.memory_space<vmem>>, vector<1x28x144xbf16>
    %4 = vector.shape_cast %3 : vector<1x28x144xbf16> to vector<28x144xbf16>
    %cst = arith.constant dense<0.000000e+00> : vector<48x144xf32>
    %5 = tpu.matmul %2, %4, %cst {dimension_numbers = #tpu.dot_dimension_numbers<[1], [0], [0], [1], [0, 0, 1, 1], [], []>} : vector<48x28xbf16>, vector<28x144xbf16>, vector<48x144xf32> -> vector<48x144xf32>
    %6 = vector.extract_strided_slice %0 {offsets = [0, 1, 0], sizes = [2, 24, 28], strides = [1, 1, 1]} : vector<2x28x28xbf16> to vector<2x24x28xbf16>
    %7 = vector.shape_cast %6 : vector<2x24x28xbf16> to vector<48x28xbf16>
    %c1 = arith.constant 1 : index
    %c0_5 = arith.constant 0 : index
    %c0_6 = arith.constant 0 : index
    %8 = vector.load %arg2[%c1, %c0_5, %c0_6] : memref<5x28x144xbf16, #tpu.memory_space<vmem>>, vector<1x28x144xbf16>
    %9 = vector.shape_cast %8 : vector<1x28x144xbf16> to vector<28x144xbf16>
    %cst_7 = arith.constant dense<0.000000e+00> : vector<48x144xf32>
    %10 = tpu.matmul %7, %9, %cst_7 {dimension_numbers = #tpu.dot_dimension_numbers<[1], [0], [0], [1], [0, 0, 1, 1], [], []>} : vector<48x28xbf16>, vector<28x144xbf16>, vector<48x144xf32> -> vector<48x144xf32>
    %11 = arith.addf %5, %10 : vector<48x144xf32>
    %12 = vector.extract_strided_slice %0 {offsets = [0, 2, 0], sizes = [2, 24, 28], strides = [1, 1, 1]} : vector<2x28x28xbf16> to vector<2x24x28xbf16>
    %13 = vector.shape_cast %12 : vector<2x24x28xbf16> to vector<48x28xbf16>
    %c2 = arith.constant 2 : index
    %c0_8 = arith.constant 0 : index
    %c0_9 = arith.constant 0 : index
    %14 = vector.load %arg2[%c2, %c0_8, %c0_9] : memref<5x28x144xbf16, #tpu.memory_space<vmem>>, vector<1x28x144xbf16>
    %15 = vector.shape_cast %14 : vector<1x28x144xbf16> to vector<28x144xbf16>
    %cst_10 = arith.constant dense<0.000000e+00> : vector<48x144xf32>
    %16 = tpu.matmul %13, %15, %cst_10 {dimension_numbers = #tpu.dot_dimension_numbers<[1], [0], [0], [1], [0, 0, 1, 1], [], []>} : vector<48x28xbf16>, vector<28x144xbf16>, vector<48x144xf32> -> vector<48x144xf32>
    %17 = arith.addf %11, %16 : vector<48x144xf32>
    %18 = vector.extract_strided_slice %0 {offsets = [0, 3, 0], sizes = [2, 24, 28], strides = [1, 1, 1]} : vector<2x28x28xbf16> to vector<2x24x28xbf16>
    %19 = vector.shape_cast %18 : vector<2x24x28xbf16> to vector<48x28xbf16>
    %c3 = arith.constant 3 : index
    %c0_11 = arith.constant 0 : index
    %c0_12 = arith.constant 0 : index
    %20 = vector.load %arg2[%c3, %c0_11, %c0_12] : memref<5x28x144xbf16, #tpu.memory_space<vmem>>, vector<1x28x144xbf16>
    %21 = vector.shape_cast %20 : vector<1x28x144xbf16> to vector<28x144xbf16>
    %cst_13 = arith.constant dense<0.000000e+00> : vector<48x144xf32>
    %22 = tpu.matmul %19, %21, %cst_13 {dimension_numbers = #tpu.dot_dimension_numbers<[1], [0], [0], [1], [0, 0, 1, 1], [], []>} : vector<48x28xbf16>, vector<28x144xbf16>, vector<48x144xf32> -> vector<48x144xf32>
    %23 = arith.addf %17, %22 : vector<48x144xf32>
    %24 = vector.extract_strided_slice %0 {offsets = [0, 4, 0], sizes = [2, 24, 28], strides = [1, 1, 1]} : vector<2x28x28xbf16> to vector<2x24x28xbf16>
    %25 = vector.shape_cast %24 : vector<2x24x28xbf16> to vector<48x28xbf16>
    %c4 = arith.constant 4 : index
    %c0_14 = arith.constant 0 : index
    %c0_15 = arith.constant 0 : index
    %26 = vector.load %arg2[%c4, %c0_14, %c0_15] : memref<5x28x144xbf16, #tpu.memory_space<vmem>>, vector<1x28x144xbf16>
    %27 = vector.shape_cast %26 : vector<1x28x144xbf16> to vector<28x144xbf16>
    %cst_16 = arith.constant dense<0.000000e+00> : vector<48x144xf32>
    %28 = tpu.matmul %25, %27, %cst_16 {dimension_numbers = #tpu.dot_dimension_numbers<[1], [0], [0], [1], [0, 0, 1, 1], [], []>} : vector<48x28xbf16>, vector<28x144xbf16>, vector<48x144xf32> -> vector<48x144xf32>
    %29 = arith.addf %23, %28 : vector<48x144xf32>
    %c0_17 = arith.constant 0 : index
    %c0_18 = arith.constant 0 : index
    %30 = vector.load %arg3[%c0_17, %c0_18] : memref<1x144xf32, #tpu.memory_space<vmem>>, vector<1x144xf32>
    %31 = vector.broadcast %30 : vector<1x144xf32> to vector<48x144xf32>
    %32 = arith.addf %29, %31 : vector<48x144xf32>
    %cst_19 = arith.constant 0.000000e+00 : f32
    %33 = vector.broadcast %cst_19 : f32 to vector<48x144xf32>
    %34 = arith.maximumf %32, %33 : vector<48x144xf32>
    %35 = vector.extract_strided_slice %34 {offsets = [0, 0], sizes = [48, 72], strides = [1, 1]} : vector<48x144xf32> to vector<48x72xf32>
    %36 = vector.extract_strided_slice %34 {offsets = [0, 72], sizes = [48, 72], strides = [1, 1]} : vector<48x144xf32> to vector<48x72xf32>
    %37 = arith.maximumf %35, %36 : vector<48x72xf32>
    %38 = vector.shape_cast %37 : vector<48x72xf32> to vector<2x12x2x72xf32>
    %cst_20 = arith.constant dense<0xFF800000> : vector<2x12x72xf32>
    %39 = vector.multi_reduction <maximumf>, %38, %cst_20 [2] : vector<2x12x2x72xf32> to vector<2x12x72xf32>
    %40 = arith.truncf %39 : vector<2x12x72xf32> to vector<2x12x72xbf16>
    %41 = vector.extract_strided_slice %40 {offsets = [0, 0, 0], sizes = [2, 8, 72], strides = [1, 1, 1]} : vector<2x12x72xbf16> to vector<2x8x72xbf16>
    %42 = vector.shape_cast %41 : vector<2x8x72xbf16> to vector<16x72xbf16>
    %c0_21 = arith.constant 0 : index
    %c0_22 = arith.constant 0 : index
    %c0_23 = arith.constant 0 : index
    %43 = vector.load %arg4[%c0_21, %c0_22, %c0_23] : memref<5x72x128xbf16, #tpu.memory_space<vmem>>, vector<1x72x128xbf16>
    %44 = vector.shape_cast %43 : vector<1x72x128xbf16> to vector<72x128xbf16>
    %cst_24 = arith.constant dense<0.000000e+00> : vector<16x128xf32>
    %45 = tpu.matmul %42, %44, %cst_24 {dimension_numbers = #tpu.dot_dimension_numbers<[1], [0], [0], [1], [0, 0, 1, 1], [], []>} : vector<16x72xbf16>, vector<72x128xbf16>, vector<16x128xf32> -> vector<16x128xf32>
    %46 = vector.extract_strided_slice %40 {offsets = [0, 1, 0], sizes = [2, 8, 72], strides = [1, 1, 1]} : vector<2x12x72xbf16> to vector<2x8x72xbf16>
    %47 = vector.shape_cast %46 : vector<2x8x72xbf16> to vector<16x72xbf16>
    %c1_25 = arith.constant 1 : index
    %c0_26 = arith.constant 0 : index
    %c0_27 = arith.constant 0 : index
    %48 = vector.load %arg4[%c1_25, %c0_26, %c0_27] : memref<5x72x128xbf16, #tpu.memory_space<vmem>>, vector<1x72x128xbf16>
    %49 = vector.shape_cast %48 : vector<1x72x128xbf16> to vector<72x128xbf16>
    %cst_28 = arith.constant dense<0.000000e+00> : vector<16x128xf32>
    %50 = tpu.matmul %47, %49, %cst_28 {dimension_numbers = #tpu.dot_dimension_numbers<[1], [0], [0], [1], [0, 0, 1, 1], [], []>} : vector<16x72xbf16>, vector<72x128xbf16>, vector<16x128xf32> -> vector<16x128xf32>
    %51 = arith.addf %45, %50 : vector<16x128xf32>
    %52 = vector.extract_strided_slice %40 {offsets = [0, 2, 0], sizes = [2, 8, 72], strides = [1, 1, 1]} : vector<2x12x72xbf16> to vector<2x8x72xbf16>
    %53 = vector.shape_cast %52 : vector<2x8x72xbf16> to vector<16x72xbf16>
    %c2_29 = arith.constant 2 : index
    %c0_30 = arith.constant 0 : index
    %c0_31 = arith.constant 0 : index
    %54 = vector.load %arg4[%c2_29, %c0_30, %c0_31] : memref<5x72x128xbf16, #tpu.memory_space<vmem>>, vector<1x72x128xbf16>
    %55 = vector.shape_cast %54 : vector<1x72x128xbf16> to vector<72x128xbf16>
    %cst_32 = arith.constant dense<0.000000e+00> : vector<16x128xf32>
    %56 = tpu.matmul %53, %55, %cst_32 {dimension_numbers = #tpu.dot_dimension_numbers<[1], [0], [0], [1], [0, 0, 1, 1], [], []>} : vector<16x72xbf16>, vector<72x128xbf16>, vector<16x128xf32> -> vector<16x128xf32>
    %57 = arith.addf %51, %56 : vector<16x128xf32>
    %58 = vector.extract_strided_slice %40 {offsets = [0, 3, 0], sizes = [2, 8, 72], strides = [1, 1, 1]} : vector<2x12x72xbf16> to vector<2x8x72xbf16>
    %59 = vector.shape_cast %58 : vector<2x8x72xbf16> to vector<16x72xbf16>
    %c3_33 = arith.constant 3 : index
    %c0_34 = arith.constant 0 : index
    %c0_35 = arith.constant 0 : index
    %60 = vector.load %arg4[%c3_33, %c0_34, %c0_35] : memref<5x72x128xbf16, #tpu.memory_space<vmem>>, vector<1x72x128xbf16>
    %61 = vector.shape_cast %60 : vector<1x72x128xbf16> to vector<72x128xbf16>
    %cst_36 = arith.constant dense<0.000000e+00> : vector<16x128xf32>
    %62 = tpu.matmul %59, %61, %cst_36 {dimension_numbers = #tpu.dot_dimension_numbers<[1], [0], [0], [1], [0, 0, 1, 1], [], []>} : vector<16x72xbf16>, vector<72x128xbf16>, vector<16x128xf32> -> vector<16x128xf32>
    %63 = arith.addf %57, %62 : vector<16x128xf32>
    %64 = vector.extract_strided_slice %40 {offsets = [0, 4, 0], sizes = [2, 8, 72], strides = [1, 1, 1]} : vector<2x12x72xbf16> to vector<2x8x72xbf16>
    %65 = vector.shape_cast %64 : vector<2x8x72xbf16> to vector<16x72xbf16>
    %c4_37 = arith.constant 4 : index
    %c0_38 = arith.constant 0 : index
    %c0_39 = arith.constant 0 : index
    %66 = vector.load %arg4[%c4_37, %c0_38, %c0_39] : memref<5x72x128xbf16, #tpu.memory_space<vmem>>, vector<1x72x128xbf16>
    %67 = vector.shape_cast %66 : vector<1x72x128xbf16> to vector<72x128xbf16>
    %cst_40 = arith.constant dense<0.000000e+00> : vector<16x128xf32>
    %68 = tpu.matmul %65, %67, %cst_40 {dimension_numbers = #tpu.dot_dimension_numbers<[1], [0], [0], [1], [0, 0, 1, 1], [], []>} : vector<16x72xbf16>, vector<72x128xbf16>, vector<16x128xf32> -> vector<16x128xf32>
    %69 = arith.addf %63, %68 : vector<16x128xf32>
    %c0_41 = arith.constant 0 : index
    %c0_42 = arith.constant 0 : index
    %70 = vector.load %arg5[%c0_41, %c0_42] : memref<1x128xf32, #tpu.memory_space<vmem>>, vector<1x128xf32>
    %71 = vector.broadcast %70 : vector<1x128xf32> to vector<16x128xf32>
    %72 = arith.addf %69, %71 : vector<16x128xf32>
    %cst_43 = arith.constant 0.000000e+00 : f32
    %73 = vector.broadcast %cst_43 : f32 to vector<16x128xf32>
    %74 = arith.maximumf %72, %73 : vector<16x128xf32>
    %75 = vector.extract_strided_slice %74 {offsets = [0, 0], sizes = [16, 64], strides = [1, 1]} : vector<16x128xf32> to vector<16x64xf32>
    %76 = vector.extract_strided_slice %74 {offsets = [0, 64], sizes = [16, 64], strides = [1, 1]} : vector<16x128xf32> to vector<16x64xf32>
    %77 = arith.maximumf %75, %76 : vector<16x64xf32>
    %78 = vector.shape_cast %77 : vector<16x64xf32> to vector<2x4x2x64xf32>
    %cst_44 = arith.constant dense<0xFF800000> : vector<2x4x64xf32>
    %79 = vector.multi_reduction <maximumf>, %78, %cst_44 [2] : vector<2x4x2x64xf32> to vector<2x4x64xf32>
    %80 = arith.truncf %79 : vector<2x4x64xf32> to vector<2x4x64xbf16>
    %81 = vector.shape_cast %80 : vector<2x4x64xbf16> to vector<2x256xbf16>
    %c0_45 = arith.constant 0 : index
    %c0_46 = arith.constant 0 : index
    %82 = vector.load %arg6[%c0_45, %c0_46] : memref<256x128xbf16, #tpu.memory_space<vmem>>, vector<256x128xbf16>
    %cst_47 = arith.constant dense<0.000000e+00> : vector<2x128xf32>
    %83 = tpu.matmul %81, %82, %cst_47 {dimension_numbers = #tpu.dot_dimension_numbers<[1], [0], [0], [1], [0, 0, 1, 1], [], []>} : vector<2x256xbf16>, vector<256x128xbf16>, vector<2x128xf32> -> vector<2x128xf32>
    %c0_48 = arith.constant 0 : index
    %c0_49 = arith.constant 0 : index
    %84 = vector.load %arg7[%c0_48, %c0_49] : memref<1x128xf32, #tpu.memory_space<vmem>>, vector<1x128xf32>
    %85 = vector.broadcast %84 : vector<1x128xf32> to vector<2x128xf32>
    %86 = arith.addf %83, %85 : vector<2x128xf32>
    %cst_50 = arith.constant 0.000000e+00 : f32
    %87 = vector.broadcast %cst_50 : f32 to vector<2x128xf32>
    %88 = arith.maximumf %86, %87 : vector<2x128xf32>
    %89 = arith.truncf %88 : vector<2x128xf32> to vector<2x128xbf16>
    %c0_51 = arith.constant 0 : index
    %c0_52 = arith.constant 0 : index
    %90 = vector.load %arg8[%c0_51, %c0_52] : memref<128x64xbf16, #tpu.memory_space<vmem>>, vector<128x64xbf16>
    %cst_53 = arith.constant dense<0.000000e+00> : vector<2x64xf32>
    %91 = tpu.matmul %89, %90, %cst_53 {dimension_numbers = #tpu.dot_dimension_numbers<[1], [0], [0], [1], [0, 0, 1, 1], [], []>} : vector<2x128xbf16>, vector<128x64xbf16>, vector<2x64xf32> -> vector<2x64xf32>
    %c0_54 = arith.constant 0 : index
    %c0_55 = arith.constant 0 : index
    %92 = vector.load %arg9[%c0_54, %c0_55] : memref<1x64xf32, #tpu.memory_space<vmem>>, vector<1x64xf32>
    %93 = vector.broadcast %92 : vector<1x64xf32> to vector<2x64xf32>
    %94 = arith.addf %91, %93 : vector<2x64xf32>
    %cst_56 = arith.constant 0.000000e+00 : f32
    %95 = vector.broadcast %cst_56 : f32 to vector<2x64xf32>
    %96 = arith.maximumf %94, %95 : vector<2x64xf32>
    %97 = arith.truncf %96 : vector<2x64xf32> to vector<2x64xbf16>
    %c0_57 = arith.constant 0 : index
    %c0_58 = arith.constant 0 : index
    %98 = vector.load %arg10[%c0_57, %c0_58] : memref<64x128xbf16, #tpu.memory_space<vmem>>, vector<64x128xbf16>
    %cst_59 = arith.constant dense<0.000000e+00> : vector<2x128xf32>
    %99 = tpu.matmul %97, %98, %cst_59 {dimension_numbers = #tpu.dot_dimension_numbers<[1], [0], [0], [1], [0, 0, 1, 1], [], []>} : vector<2x64xbf16>, vector<64x128xbf16>, vector<2x128xf32> -> vector<2x128xf32>
    %c0_60 = arith.constant 0 : index
    %c0_61 = arith.constant 0 : index
    %100 = vector.load %arg11[%c0_60, %c0_61] : memref<1x128xf32, #tpu.memory_space<vmem>>, vector<1x128xf32>
    %101 = vector.broadcast %100 : vector<1x128xf32> to vector<2x128xf32>
    %102 = arith.addf %99, %101 : vector<2x128xf32>
    %cst_62 = arith.constant 0.000000e+00 : f32
    %103 = vector.broadcast %cst_62 : f32 to vector<2x128xf32>
    %104 = arith.cmpf oge, %102, %103 : vector<2x128xf32>
    %cst_63 = arith.constant 0.000000e+00 : f32
    %105 = vector.broadcast %cst_63 : f32 to vector<2x128xf32>
    %106 = arith.subf %105, %102 : vector<2x128xf32>
    %107 = arith.select %104, %106, %102 : vector<2x128xi1>, vector<2x128xf32>
    %108 = math.exp %107 : vector<2x128xf32>
    %cst_64 = arith.constant 1.000000e+00 : f32
    %109 = vector.broadcast %cst_64 : f32 to vector<2x128xf32>
    %110 = arith.addf %109, %108 : vector<2x128xf32>
    %cst_65 = arith.constant 1.000000e+00 : f32
    %111 = vector.broadcast %cst_65 : f32 to vector<2x128xf32>
    %112 = arith.divf %111, %110 : vector<2x128xf32>
    %cst_66 = arith.constant 1.000000e+00 : f32
    %113 = vector.broadcast %cst_66 : f32 to vector<2x128xf32>
    %114 = arith.addf %113, %108 : vector<2x128xf32>
    %115 = arith.divf %108, %114 : vector<2x128xf32>
    %116 = arith.select %104, %112, %115 : vector<2x128xi1>, vector<2x128xf32>
    %c0_67 = arith.constant 0 : index
    %c0_68 = arith.constant 0 : index
    %117 = vector.load %arg12[%c0_67, %c0_68] : memref<2x128xf32, #tpu.memory_space<vmem>>, vector<2x128xf32>
    tpu.vector_store %arg12[%c0_67, %c0_68], %116 {strides = array<i32>} : memref<2x128xf32, #tpu.memory_space<vmem>>, vector<2x128xf32>,
    return
  }
  func.func @transform_0(%arg0: i32) -> (i32, i32, i32) {
    %c0_i32 = arith.constant 0 : i32
    %c0_i32_0 = arith.constant 0 : i32
    %c0_i32_1 = arith.constant 0 : i32
    return %arg0, %c0_i32, %c0_i32_0 : i32, i32, i32
  }
  func.func @transform_1(%arg0: i32) -> (i32, i32, i32) {
    %c0_i32 = arith.constant 0 : i32
    %c0_i32_0 = arith.constant 0 : i32
    %c0_i32_1 = arith.constant 0 : i32
    %c0_i32_2 = arith.constant 0 : i32
    return %c0_i32, %c0_i32_0, %c0_i32_1 : i32, i32, i32
  }
  func.func @transform_2(%arg0: i32) -> (i32, i32) {
    %c0_i32 = arith.constant 0 : i32
    %c0_i32_0 = arith.constant 0 : i32
    %c0_i32_1 = arith.constant 0 : i32
    return %c0_i32, %c0_i32_0 : i32, i32
  }
  func.func @transform_3(%arg0: i32) -> (i32, i32, i32) {
    %c0_i32 = arith.constant 0 : i32
    %c0_i32_0 = arith.constant 0 : i32
    %c0_i32_1 = arith.constant 0 : i32
    %c0_i32_2 = arith.constant 0 : i32
    return %c0_i32, %c0_i32_0, %c0_i32_1 : i32, i32, i32
  }
  func.func @transform_4(%arg0: i32) -> (i32, i32) {
    %c0_i32 = arith.constant 0 : i32
    %c0_i32_0 = arith.constant 0 : i32
    %c0_i32_1 = arith.constant 0 : i32
    return %c0_i32, %c0_i32_0 : i32, i32
  }
  func.func @transform_5(%arg0: i32) -> (i32, i32) {
    %c0_i32 = arith.constant 0 : i32
    %c0_i32_0 = arith.constant 0 : i32
    %c0_i32_1 = arith.constant 0 : i32
    return %c0_i32, %c0_i32_0 : i32, i32
  }
  func.func @transform_6(%arg0: i32) -> (i32, i32) {
    %c0_i32 = arith.constant 0 : i32
    %c0_i32_0 = arith.constant 0 : i32
    %c0_i32_1 = arith.constant 0 : i32
    return %c0_i32, %c0_i32_0 : i32, i32
  }
  func.func @transform_7(%arg0: i32) -> (i32, i32) {
    %c0_i32 = arith.constant 0 : i32
    %c0_i32_0 = arith.constant 0 : i32
    %c0_i32_1 = arith.constant 0 : i32
    return %c0_i32, %c0_i32_0 : i32, i32
  }
  func.func @transform_8(%arg0: i32) -> (i32, i32) {
    %c0_i32 = arith.constant 0 : i32
    %c0_i32_0 = arith.constant 0 : i32
    %c0_i32_1 = arith.constant 0 : i32
    return %c0_i32, %c0_i32_0 : i32, i32
  }
  func.func @transform_9(%arg0: i32) -> (i32, i32) {
    %c0_i32 = arith.constant 0 : i32
    %c0_i32_0 = arith.constant 0 : i32
    %c0_i32_1 = arith.constant 0 : i32
    return %c0_i32, %c0_i32_0 : i32, i32
  }
  func.func @transform_10(%arg0: i32) -> (i32, i32) {
    %c0_i32 = arith.constant 0 : i32
    %c0_i32_0 = arith.constant 0 : i32
    %c0_i32_1 = arith.constant 0 : i32
    return %c0_i32, %c0_i32_0 : i32, i32
  }
  func.func @transform_11(%arg0: i32) -> (i32, i32) {
    %c0_i32 = arith.constant 0 : i32
    %c0_i32_0 = arith.constant 0 : i32
    return %arg0, %c0_i32 : i32, i32
  }
}

</mosaic_0001>

<llo_original>
// kernel: conditional_conv_discriminator.1
$region0: #{conditional_conv_discriminator.1}
  #allocation0 [shape = 'u32[]', space=smem, size = 0x4, offset = 0x4, fixed_abs, tag = 'smem constant byte address 0x4 - core index']
  #allocation1 [shape = 'u32[144,128]{1,0:T(1,128)}', space=vmem, size = 0x12000, scoped, tag = 'internal scratch']
  %s0 = inlined_call_operand.vmem [shape: bf16[2,28,28], index: 0, kind: input, shape index: {}]
  %s1 = inlined_call_operand.hbm [shape: bf16[5,28,144], index: 1, kind: input, shape index: {}]
  %s2 = inlined_call_operand.vmem [shape: f32[1,144], index: 2, kind: input, shape index: {}]
  %s3 = inlined_call_operand.vmem [shape: bf16[5,72,128], index: 3, kind: input, shape index: {}]
  %s4 = inlined_call_operand.hbm [shape: f32[1,128], index: 4, kind: input, shape index: {}]
  %s5 = inlined_call_operand.hbm [shape: bf16[256,128], index: 5, kind: input, shape index: {}]
  %s6 = inlined_call_operand.hbm [shape: f32[1,128], index: 6, kind: input, shape index: {}]
  %s7 = inlined_call_operand.vmem [shape: bf16[128,64], index: 7, kind: input, shape index: {}]
  %s8 = inlined_call_operand.hbm [shape: f32[1,64], index: 8, kind: input, shape index: {}]
  %s9 = inlined_call_operand.hbm [shape: bf16[64,128], index: 9, kind: input, shape index: {}]
  %s10 = inlined_call_operand.vmem [shape: f32[1,128], index: 10, kind: input, shape index: {}]
  %s11 = inlined_call_operand.hbm [shape: f32[2,128], index: 11, kind: output, shape index: {}]
  %s12 = sld [smem:[#allocation0]]
  $region78: #{conditional_conv_discriminator.1} parent=0
    _
  %s14 = ssub.s32 1, %s12
  %s15 = scalar_select 0, %s14, %s12
  $region1: #{conditional_conv_discriminator.1} parent=0
    #allocation2 [shape = 'u8[81920]{0}', space=vmem, size = 0x14000, scoped, tag = 'input window, operand 1, single buffered']
    #allocation3 [shape = 's32[1]{0}', space=sflag, size = 0x4, scoped, tag = 'scoped memory for conditional_conv_discriminator.1']
    #allocation4 [shape = 's32[1]{0}', space=sflag, size = 0x4, scoped, tag = 'scoped memory for conditional_conv_discriminator.1']
    #allocation5 [shape = 'u8[512]{0}', space=vmem, size = 0x400, scoped, tag = 'input window, operand 4, single buffered']
    #allocation6 [shape = 's32[1]{0}', space=sflag, size = 0x4, scoped, tag = 'scoped memory for conditional_conv_discriminator.1']
    #allocation7 [shape = 'u8[65536]{0}', space=vmem, size = 0x10000, scoped, tag = 'input window, operand 5, single buffered']
    #allocation8 [shape = 'u8[512]{0}', space=vmem, size = 0x400, scoped, tag = 'input window, operand 6, single buffered']
    #allocation9 [shape = 's32[1]{0}', space=sflag, size = 0x4, scoped, tag = 'scoped memory for conditional_conv_discriminator.1']
    #allocation10 [shape = 'u8[512]{0}', space=vmem, size = 0x400, scoped, tag = 'input window, operand 8, single buffered']
    #allocation11 [shape = 'u8[16384]{0}', space=vmem, size = 0x4000, scoped, tag = 'input window, operand 9, single buffered']
    #allocation12 [shape = 's32[1]{0}', space=sflag, size = 0x4, scoped, tag = 'scoped memory for conditional_conv_discriminator.1']
    #allocation13 [shape = 'u8[1024]{0}', space=vmem, size = 0x400, scoped, tag = 'output window, operand 0, single buffered']
    %16 = vsyncpa [#allocation3], 0
    %17 = vsyncpa [#allocation6], 0
    %18 = vsyncpa [#allocation9], 0
    %19 = vsyncpa [#allocation12], 0
    %20 = vsyncpa [#allocation4], 0
    // Predicated region
    $region2: #{conditional_conv_discriminator.1} parent=1 // pred_check
      _
    $region3: #{conditional_conv_discriminator.1} parent=1 // pred_check_branch
      %22 = sbr.rel (0) target = $region5
    $region4: #{conditional_conv_discriminator.1} parent=1 // pred_region
      _
    $region5: #{conditional_conv_discriminator.1} parent=1 // pred_fallthru
      _
    // Predicated region
    $region6: #{conditional_conv_discriminator.1} parent=1 // pred_check
      _
    $region7: #{conditional_conv_discriminator.1} parent=1 // pred_check_branch
      %24 = sbr.rel (0) target = $region9
    $region8: #{conditional_conv_discriminator.1} parent=1 // pred_region
      %s26 = ssub.s32 2560, 2560
      %27 = vsyncadd [#allocation3], %s26
      %s28 = sshll.u32 [#allocation2], 4
      %s29 = int_to_ptr.vmem [resolvable:$true] %s28
      %34 = dma.hbm_to_vmem [thread:$0]  %s1, 2560, %s29, [#allocation3], 128, 128, 8
    $region9: #{conditional_conv_discriminator.1} parent=1 // pred_fallthru
      _
    // Predicated region
    $region10: #{conditional_conv_discriminator.1} parent=1 // pred_check
      _
    $region11: #{conditional_conv_discriminator.1} parent=1 // pred_check_branch
      %36 = sbr.rel (0) target = $region13
    $region12: #{conditional_conv_discriminator.1} parent=1 // pred_region
      _
    $region13: #{conditional_conv_discriminator.1} parent=1 // pred_fallthru
      _
    // Predicated region
    $region14: #{conditional_conv_discriminator.1} parent=1 // pred_check
      _
    $region15: #{conditional_conv_discriminator.1} parent=1 // pred_check_branch
      %38 = sbr.rel (0) target = $region17
    $region16: #{conditional_conv_discriminator.1} parent=1 // pred_region
      _
    $region17: #{conditional_conv_discriminator.1} parent=1 // pred_fallthru
      _
    // Predicated region
    $region18: #{conditional_conv_discriminator.1} parent=1 // pred_check
      _
    $region19: #{conditional_conv_discriminator.1} parent=1 // pred_check_branch
      %40 = sbr.rel (0) target = $region21
    $region20: #{conditional_conv_discriminator.1} parent=1 // pred_region
      %s42 = ssub.s32 16, 16
      %43 = vsyncadd [#allocation6], %s42
      %s45 = sshll.u32 [#allocation5], 4
      %s46 = int_to_ptr.vmem [resolvable:$true] %s45
      %48 = dma.hbm_to_vmem [thread:$0]  %s4, 16, %s46, [#allocation6]
    $region21: #{conditional_conv_discriminator.1} parent=1 // pred_fallthru
      _
    // Predicated region
    $region22: #{conditional_conv_discriminator.1} parent=1 // pred_check
      _
    $region23: #{conditional_conv_discriminator.1} parent=1 // pred_check_branch
      %50 = sbr.rel (0) target = $region25
    $region24: #{conditional_conv_discriminator.1} parent=1 // pred_region
      %s52 = ssub.s32 2048, 2048
      %53 = vsyncadd [#allocation6], %s52
      %s54 = sshll.u32 [#allocation7], 4
      %s55 = int_to_ptr.vmem [resolvable:$true] %s54
      %60 = dma.hbm_to_vmem [thread:$0]  %s5, 2048, %s55, [#allocation6], 64, 64, 4
    $region25: #{conditional_conv_discriminator.1} parent=1 // pred_fallthru
      _
    // Predicated region
    $region26: #{conditional_conv_discriminator.1} parent=1 // pred_check
      _
    $region27: #{conditional_conv_discriminator.1} parent=1 // pred_check_branch
      %62 = sbr.rel (0) target = $region29
    $region28: #{conditional_conv_discriminator.1} parent=1 // pred_region
      %s64 = ssub.s32 16, 16
      %65 = vsyncadd [#allocation9], %s64
      %s67 = sshll.u32 [#allocation8], 4
      %s68 = int_to_ptr.vmem [resolvable:$true] %s67
      %70 = dma.hbm_to_vmem [thread:$0]  %s6, 16, %s68, [#allocation9]
    $region29: #{conditional_conv_discriminator.1} parent=1 // pred_fallthru
      _
    // Predicated region
    $region30: #{conditional_conv_discriminator.1} parent=1 // pred_check
      _
    $region31: #{conditional_conv_discriminator.1} parent=1 // pred_check_branch
      %72 = sbr.rel (0) target = $region33
    $region32: #{conditional_conv_discriminator.1} parent=1 // pred_region
      _
    $region33: #{conditional_conv_discriminator.1} parent=1 // pred_fallthru
      _
    // Predicated region
    $region34: #{conditional_conv_discriminator.1} parent=1 // pred_check
      _
    $region35: #{conditional_conv_discriminator.1} parent=1 // pred_check_branch
      %74 = sbr.rel (0) target = $region37
    $region36: #{conditional_conv_discriminator.1} parent=1 // pred_region
      %s76 = ssub.s32 16, 16
      %77 = vsyncadd [#allocation9], %s76
      %s79 = sshll.u32 [#allocation10], 4
      %s80 = int_to_ptr.vmem [resolvable:$true] %s79
      %82 = dma.hbm_to_vmem [thread:$0]  %s8, 16, %s80, [#allocation9]
    $region37: #{conditional_conv_discriminator.1} parent=1 // pred_fallthru
      _
    // Predicated region
    $region38: #{conditional_conv_discriminator.1} parent=1 // pred_check
      _
    $region39: #{conditional_conv_discriminator.1} parent=1 // pred_check_branch
      %84 = sbr.rel (0) target = $region41
    $region40: #{conditional_conv_discriminator.1} parent=1 // pred_region
      %s86 = ssub.s32 512, 512
      %87 = vsyncadd [#allocation12], %s86
      %s88 = sshll.u32 [#allocation11], 4
      %s89 = int_to_ptr.vmem [resolvable:$true] %s88
      %94 = dma.hbm_to_vmem [thread:$0]  %s9, 512, %s89, [#allocation12], 64, 64, 4
    $region41: #{conditional_conv_discriminator.1} parent=1 // pred_fallthru
      _
    // Predicated region
    $region42: #{conditional_conv_discriminator.1} parent=1 // pred_check
      _
    $region43: #{conditional_conv_discriminator.1} parent=1 // pred_check_branch
      %96 = sbr.rel (0) target = $region45
    $region44: #{conditional_conv_discriminator.1} parent=1 // pred_region
      _
    $region45: #{conditional_conv_discriminator.1} parent=1 // pred_fallthru
      _
    // Predicated region
    $region46: #{conditional_conv_discriminator.1} parent=1 // pred_check
      _
    $region47: #{conditional_conv_discriminator.1} parent=1 // pred_check_branch
      %98 = sbr.rel (0) target = $region49
    $region48: #{conditional_conv_discriminator.1} parent=1 // pred_region
      %99 = dma.done [#allocation3], 2560
    $region49: #{conditional_conv_discriminator.1} parent=1 // pred_fallthru
      _
    // Predicated region
    $region50: #{conditional_conv_discriminator.1} parent=1 // pred_check
      _
    $region51: #{conditional_conv_discriminator.1} parent=1 // pred_check_branch
      %101 = sbr.rel (0) target = $region53
    $region52: #{conditional_conv_discriminator.1} parent=1 // pred_region
      %102 = dma.done [#allocation6], 16
    $region53: #{conditional_conv_discriminator.1} parent=1 // pred_fallthru
      _
    // Predicated region
    $region54: #{conditional_conv_discriminator.1} parent=1 // pred_check
      _
    $region55: #{conditional_conv_discriminator.1} parent=1 // pred_check_branch
      %104 = sbr.rel (0) target = $region57
    $region56: #{conditional_conv_discriminator.1} parent=1 // pred_region
      %105 = dma.done [#allocation6], 2048
    $region57: #{conditional_conv_discriminator.1} parent=1 // pred_fallthru
      _
    // Predicated region
    $region58: #{conditional_conv_discriminator.1} parent=1 // pred_check
      _
    $region59: #{conditional_conv_discriminator.1} parent=1 // pred_check_branch
      %107 = sbr.rel (0) target = $region61
    $region60: #{conditional_conv_discriminator.1} parent=1 // pred_region
      %108 = dma.done [#allocation9], 16
    $region61: #{conditional_conv_discriminator.1} parent=1 // pred_fallthru
      _
    // Predicated region
    $region62: #{conditional_conv_discriminator.1} parent=1 // pred_check
      _
    $region63: #{conditional_conv_discriminator.1} parent=1 // pred_check_branch
      %110 = sbr.rel (0) target = $region65
    $region64: #{conditional_conv_discriminator.1} parent=1 // pred_region
      %111 = dma.done [#allocation9], 16
    $region65: #{conditional_conv_discriminator.1} parent=1 // pred_fallthru
      _
    // Predicated region
    $region66: #{conditional_conv_discriminator.1} parent=1 // pred_check
      _
    $region67: #{conditional_conv_discriminator.1} parent=1 // pred_check_branch
      %113 = sbr.rel (0) target = $region69
    $region68: #{conditional_conv_discriminator.1} parent=1 // pred_region
      %114 = dma.done [#allocation12], 512
    $region69: #{conditional_conv_discriminator.1} parent=1 // pred_fallthru
      _
    %v116 = vld [vmem:[%s0] sm:$0xf]
    %v117 = vld [vmem:[%s0 + $0x4] sm:$0xf]
    %v118 = vld [vmem:[%s0 + $0x8] sm:$0xf]
    %v119 = vld [vmem:[%s0 + $0xc] sm:$0x3]
    %v120 = vld [vmem:[%s0 + $0x10] sm:$0xf]
    %v121 = vld [vmem:[%s0 + $0x14] sm:$0xf]
    %v122 = vld [vmem:[%s0 + $0x18] sm:$0xf]
    %v123 = vld [vmem:[%s0 + $0x1c] sm:$0x3]
    %v124 = vld [vmem:[#allocation2] sm:$0xff]
    %v125 = vld [vmem:[#allocation2 + $0x8] sm:$0xff]
    %v126 = vld [vmem:[#allocation2 + $0x10] sm:$0xff]
    %v127 = vld [vmem:[#allocation2 + $0x18] sm:$0x33]
    %vm128 = vsmask.f32 3328
    %vm129 = vsmask.f32 7440
    %vm130 = vmor %vm128, %vm129
    %v132 = vshrl.u32 %v116, 16
    %v134 = vrot.slane %v132, 4
    %v135 = vshll.u32 %v116, 16
    %v137 = vrot.slane %v135, 5
    %v138 = vor.u32 %v134, %v137
    %v139 = vrot.slane %v138, 4
    %v141 = vshll.u32 %v117, 16
    %v143 = vrot.slane %v141, 5
    %v144 = vsel %vm130, %v139, %v143
    %v145 = vshrl.u32 %v117, 16
    %v147 = vrot.slane %v145, 4
    %v148 = vor.u32 %v147, %v143
    %v149 = vrot.slane %v148, 4
    %v151 = vshll.u32 %v118, 16
    %v153 = vrot.slane %v151, 5
    %v154 = vsel %vm130, %v149, %v153
    %v155 = vshrl.u32 %v118, 16
    %v157 = vrot.slane %v155, 4
    %v158 = vor.u32 %v157, %v153
    %v159 = vrot.slane %v158, 4
    %v161 = vshll.u32 %v119, 16
    %v163 = vrot.slane %v161, 5
    %v164 = vsel %vm130, %v159, %v163
    %v166 = vshrl.u32 %v120, 16
    %v168 = vrot.slane %v166, 4
    %v169 = vshll.u32 %v120, 16
    %v171 = vrot.slane %v169, 5
    %v172 = vor.u32 %v168, %v171
    %v173 = vrot.slane %v172, 4
    %v175 = vshll.u32 %v121, 16
    %v177 = vrot.slane %v175, 5
    %v178 = vsel %vm130, %v173, %v177
    %v179 = vshrl.u32 %v121, 16
    %v181 = vrot.slane %v179, 4
    %v182 = vor.u32 %v181, %v177
    %v183 = vrot.slane %v182, 4
    %v185 = vshll.u32 %v122, 16
    %v187 = vrot.slane %v185, 5
    %v188 = vsel %vm130, %v183, %v187
    %v189 = vshrl.u32 %v122, 16
    %v191 = vrot.slane %v189, 4
    %v192 = vor.u32 %v191, %v187
    %v193 = vrot.slane %v192, 4
    %v195 = vshll.u32 %v123, 16
    %v197 = vrot.slane %v195, 5
    %v198 = vsel %vm130, %v193, %v197
    %s199 = scalar_lea.vmem [#allocation2], 32
    %v200 = vld [vmem:[%s199] sm:$0xff]
    %v201 = vld [vmem:[%s199 + $0x8] sm:$0xff]
    %v202 = vld [vmem:[%s199 + $0x10] sm:$0xff]
    %v203 = vld [vmem:[%s199 + $0x18] sm:$0x33]
    %v204 = vunpack.c.l.b16 %v144
    %v205 = vunpack.c.l.b16 %v154
    %v206 = vunpack.c.l.b16 %v164
    %v207 = vunpack.c.l.b16 %v178
    %v208 = vunpack.c.l.b16 %v188
    %v209 = vunpack.c.l.b16 %v198
    %v210 = vpack.c.b16 %v205, %v204
    %v211 = vpack.c.b16 %v207, %v206
    %v212 = vpack.c.b16 %v209, %v208
    %v217 = vunpack.c.l.b16 %v200
    %v218 = vunpack.c.h.b16 %v200
    %v219 = vunpack.c.l.b16 %v201
    %v220 = vunpack.c.h.b16 %v201
    %v221 = vunpack.c.l.b16 %v202
    %v222 = vunpack.c.h.b16 %v202
    %v223 = vunpack.c.l.b16 %v203
    %v224 = vunpack.c.h.b16 %v203
    %v225 = vpack.c.b16 %v219, %v217
    %v226 = vpack.c.b16 %v220, %v218
    %v227 = vpack.c.b16 %v223, %v221
    %v228 = vpack.c.b16 %v224, %v222
    %vm231 = vcmask 228352
    %v233 = vsel %vm231, %v210, 0
    %v236 = vsel %vm231, %v211, 0
    %v239 = vsel %vm231, %v212, 0
    %vm241 = vcmask 1045504
    %v243 = vsel %vm241, %v227, 0
    %v246 = vsel %vm241, %v228, 0
    %248 = vmatprep.subr.bf16.mxu0 %v226
    %249 = vmatpush1.bf16.msra.mxu0 %v225
    %250 = vmatprep.subr.bf16.mxu0 %v246
    %251 = vmatpush1.bf16.msra.mxu0 %v243
    %252 = vmatprep.subr.bf16.mxu0 0
    %253 = vmatpush1.bf16.msra.mxu0 0
    %254 = vmatprep.subr.bf16.mxu0 0
    %255 = vmatpush1.bf16.msra.mxu0 0
    %256 = vmatprep.subr.bf16.mxu0 0
    %257 = vmatpush1.bf16.msra.mxu0 0
    %258 = vmatprep.subr.bf16.mxu0 0
    %259 = vmatpush1.bf16.msra.mxu0 0
    %260 = vmatprep.subr.bf16.mxu0 0
    %261 = vmatpush1.bf16.msra.mxu0 0
    %262 = vmatprep.subr.bf16.mxu0 0
    %263 = vmatpush1.bf16.msra.mxu0 0
    %264 = vmatprep.subr.bf16.mxu0 0
    %265 = vmatpush1.bf16.msra.mxu0 0
    %266 = vmatprep.subr.bf16.mxu0 0
    %267 = vmatpush1.bf16.msra.mxu0 0
    %268 = vmatprep.subr.bf16.mxu0 0
    %269 = vmatpush1.bf16.msra.mxu0 0
    %270 = vmatprep.subr.bf16.mxu0 0
    %271 = vmatpush1.bf16.msra.mxu0 0
    %272 = vmatprep.subr.bf16.mxu0 0
    %273 = vmatpush1.bf16.msra.mxu0 0
    %274 = vmatprep.subr.bf16.mxu0 0
    %275 = vmatpush1.bf16.msra.mxu0 0
    %276 = vmatprep.subr.bf16.mxu0 0
    %277 = vmatpush1.bf16.msra.mxu0 0
    %278 = vmatprep.subr.bf16.mxu0 0
    %279 = vmatpush1.bf16.msra.mxu0 0
    %280 = vmatprep.mubr.bf16.mxu0 0
    %281 = vmatmul.mubr.bf16.gmra.mrb[0].mxu0 %v233
    %v282 = vpop.f32.mrb[0].mxu0
    %v283 = vadd.f32 0.0, %v282
    %v284 = vpop.f32.mrb[0].mxu0
    %v285 = vadd.f32 0.0, %v284
    %v286 = vpop.f32.mrb[0].mxu0
    %v287 = vadd.f32 0.0, %v286
    %v288 = vpop.f32.mrb[0].mxu0
    %v289 = vadd.f32 0.0, %v288
    %290 = vmatprep.mubr.bf16.mxu0 0
    %291 = vmatmul.mubr.bf16.gmra.mrb[0].mxu0 %v236
    %v292 = vpop.f32.mrb[0].mxu0
    %v293 = vadd.f32 0.0, %v292
    %v294 = vpop.f32.mrb[0].mxu0
    %v295 = vadd.f32 0.0, %v294
    %v296 = vpop.f32.mrb[0].mxu0
    %v297 = vadd.f32 0.0, %v296
    %v298 = vpop.f32.mrb[0].mxu0
    %v299 = vadd.f32 0.0, %v298
    %300 = vmatprep.mubr.bf16.mxu0 0
    %301 = vmatmul.mubr.bf16.gmra.mrb[0].mxu0 %v239
    %v302 = vpop.f32.mrb[0].mxu0
    %v303 = vadd.f32 0.0, %v302
    %v304 = vpop.f32.mrb[0].mxu0
    %v305 = vadd.f32 0.0, %v304
    %v306 = vpop.f32.mrb[0].mxu0
    %v307 = vadd.f32 0.0, %v306
    %v308 = vpop.f32.mrb[0].mxu0
    %v309 = vadd.f32 0.0, %v308
    %310 = vdwg.mxu0
    %v317 = vunpack.c.l.b16 %v116
    %v318 = vunpack.c.l.b16 %v117
    %v319 = vunpack.c.l.b16 %v118
    %v320 = vunpack.c.l.b16 %v120
    %v321 = vunpack.c.l.b16 %v121
    %v322 = vunpack.c.l.b16 %v122
    %v323 = vpack.c.b16 %v318, %v317
    %v324 = vpack.c.b16 %v320, %v319
    %v325 = vpack.c.b16 %v322, %v321
    %v330 = vunpack.c.l.b16 %v124
    %v331 = vunpack.c.h.b16 %v124
    %v332 = vunpack.c.l.b16 %v125
    %v333 = vunpack.c.h.b16 %v125
    %v334 = vunpack.c.l.b16 %v126
    %v335 = vunpack.c.h.b16 %v126
    %v336 = vunpack.c.l.b16 %v127
    %v337 = vunpack.c.h.b16 %v127
    %v338 = vpack.c.b16 %v332, %v330
    %v339 = vpack.c.b16 %v333, %v331
    %v340 = vpack.c.b16 %v336, %v334
    %v341 = vpack.c.b16 %v337, %v335
    %v345 = vsel %vm231, %v323, 0
    %v348 = vsel %vm231, %v324, 0
    %v351 = vsel %vm231, %v325, 0
    %v354 = vsel %vm241, %v340, 0
    %v357 = vsel %vm241, %v341, 0
    %359 = vmatprep.subr.bf16.mxu0 %v339
    %360 = vmatpush1.bf16.msra.mxu0 %v338
    %361 = vmatprep.subr.bf16.mxu0 %v357
    %362 = vmatpush1.bf16.msra.mxu0 %v354
    %363 = vmatprep.subr.bf16.mxu0 0
    %364 = vmatpush1.bf16.msra.mxu0 0
    %365 = vmatprep.subr.bf16.mxu0 0
    %366 = vmatpush1.bf16.msra.mxu0 0
    %367 = vmatprep.subr.bf16.mxu0 0
    %368 = vmatpush1.bf16.msra.mxu0 0
    %369 = vmatprep.subr.bf16.mxu0 0
    %370 = vmatpush1.bf16.msra.mxu0 0
    %371 = vmatprep.subr.bf16.mxu0 0
    %372 = vmatpush1.bf16.msra.mxu0 0
    %373 = vmatprep.subr.bf16.mxu0 0
    %374 = vmatpush1.bf16.msra.mxu0 0
    %375 = vmatprep.subr.bf16.mxu0 0
    %376 = vmatpush1.bf16.msra.mxu0 0
    %377 = vmatprep.subr.bf16.mxu0 0
    %378 = vmatpush1.bf16.msra.mxu0 0
    %379 = vmatprep.subr.bf16.mxu0 0
    %380 = vmatpush1.bf16.msra.mxu0 0
    %381 = vmatprep.subr.bf16.mxu0 0
    %382 = vmatpush1.bf16.msra.mxu0 0
    %383 = vmatprep.subr.bf16.mxu0 0
    %384 = vmatpush1.bf16.msra.mxu0 0
    %385 = vmatprep.subr.bf16.mxu0 0
    %386 = vmatpush1.bf16.msra.mxu0 0
    %387 = vmatprep.subr.bf16.mxu0 0
    %388 = vmatpush1.bf16.msra.mxu0 0
    %389 = vmatprep.subr.bf16.mxu0 0
    %390 = vmatpush1.bf16.msra.mxu0 0
    %391 = vmatprep.mubr.bf16.mxu0 0
    %392 = vmatmul.mubr.bf16.gmra.mrb[0].mxu0 %v345
    %v393 = vpop.f32.mrb[0].mxu0
    %v394 = vadd.f32 %v283, %v393
    %v395 = vpop.f32.mrb[0].mxu0
    %v396 = vadd.f32 %v285, %v395
    %v397 = vpop.f32.mrb[0].mxu0
    %v398 = vadd.f32 %v287, %v397
    %v399 = vpop.f32.mrb[0].mxu0
    %v400 = vadd.f32 %v289, %v399
    %401 = vmatprep.mubr.bf16.mxu0 0
    %402 = vmatmul.mubr.bf16.gmra.mrb[0].mxu0 %v348
    %v403 = vpop.f32.mrb[0].mxu0
    %v404 = vadd.f32 %v293, %v403
    %v405 = vpop.f32.mrb[0].mxu0
    %v406 = vadd.f32 %v295, %v405
    %v407 = vpop.f32.mrb[0].mxu0
    %v408 = vadd.f32 %v297, %v407
    %v409 = vpop.f32.mrb[0].mxu0
    %v410 = vadd.f32 %v299, %v409
    %411 = vmatprep.mubr.bf16.mxu0 0
    %412 = vmatmul.mubr.bf16.gmra.mrb[0].mxu0 %v351
    %v413 = vpop.f32.mrb[0].mxu0
    %v414 = vadd.f32 %v303, %v413
    %v415 = vpop.f32.mrb[0].mxu0
    %v416 = vadd.f32 %v305, %v415
    %v417 = vpop.f32.mrb[0].mxu0
    %v418 = vadd.f32 %v307, %v417
    %v419 = vpop.f32.mrb[0].mxu0
    %v420 = vadd.f32 %v309, %v419
    %421 = vdwg.mxu0
    %vm424 = vcmask 1042432
    %vm425 = vcmask 1046532
    %vm426 = vmor %vm424, %vm425
    %v427 = vrot.slane %v116, 5
    %v428 = vrot.slane %v427, 4
    %v429 = vrot.slane %v117, 5
    %v430 = vsel %vm426, %v428, %v429
    %v431 = vrot.slane %v429, 4
    %v432 = vrot.slane %v118, 5
    %v433 = vsel %vm426, %v431, %v432
    %v434 = vrot.slane %v432, 4
    %v435 = vrot.slane %v119, 5
    %v436 = vsel %vm426, %v434, %v435
    %v437 = vrot.slane %v120, 5
    %v438 = vrot.slane %v437, 4
    %v439 = vrot.slane %v121, 5
    %v440 = vsel %vm426, %v438, %v439
    %v441 = vrot.slane %v439, 4
    %v442 = vrot.slane %v122, 5
    %v443 = vsel %vm426, %v441, %v442
    %v444 = vrot.slane %v442, 4
    %v445 = vrot.slane %v123, 5
    %v446 = vsel %vm426, %v444, %v445
    %s447 = scalar_lea.vmem [#allocation2], 64
    %v448 = vld [vmem:[%s447] sm:$0xff]
    %v449 = vld [vmem:[%s447 + $0x8] sm:$0xff]
    %v450 = vld [vmem:[%s447 + $0x10] sm:$0xff]
    %v451 = vld [vmem:[%s447 + $0x18] sm:$0x33]
    %v452 = vunpack.c.l.b16 %v430
    %v453 = vunpack.c.l.b16 %v433
    %v454 = vunpack.c.l.b16 %v436
    %v455 = vunpack.c.l.b16 %v440
    %v456 = vunpack.c.l.b16 %v443
    %v457 = vunpack.c.l.b16 %v446
    %v458 = vpack.c.b16 %v453, %v452
    %v459 = vpack.c.b16 %v455, %v454
    %v460 = vpack.c.b16 %v457, %v456
    %v465 = vunpack.c.l.b16 %v448
    %v466 = vunpack.c.h.b16 %v448
    %v467 = vunpack.c.l.b16 %v449
    %v468 = vunpack.c.h.b16 %v449
    %v469 = vunpack.c.l.b16 %v450
    %v470 = vunpack.c.h.b16 %v450
    %v471 = vunpack.c.l.b16 %v451
    %v472 = vunpack.c.h.b16 %v451
    %v473 = vpack.c.b16 %v467, %v465
    %v474 = vpack.c.b16 %v468, %v466
    %v475 = vpack.c.b16 %v471, %v469
    %v476 = vpack.c.b16 %v472, %v470
    %v480 = vsel %vm231, %v458, 0
    %v483 = vsel %vm231, %v459, 0
    %v486 = vsel %vm231, %v460, 0
    %v489 = vsel %vm241, %v475, 0
    %v492 = vsel %vm241, %v476, 0
    %494 = vmatprep.subr.bf16.mxu0 %v474
    %495 = vmatpush1.bf16.msra.mxu0 %v473
    %496 = vmatprep.subr.bf16.mxu0 %v492
    %497 = vmatpush1.bf16.msra.mxu0 %v489
    %498 = vmatprep.subr.bf16.mxu0 0
    %499 = vmatpush1.bf16.msra.mxu0 0
    %500 = vmatprep.subr.bf16.mxu0 0
    %501 = vmatpush1.bf16.msra.mxu0 0
    %502 = vmatprep.subr.bf16.mxu0 0
    %503 = vmatpush1.bf16.msra.mxu0 0
    %504 = vmatprep.subr.bf16.mxu0 0
    %505 = vmatpush1.bf16.msra.mxu0 0
    %506 = vmatprep.subr.bf16.mxu0 0
    %507 = vmatpush1.bf16.msra.mxu0 0
    %508 = vmatprep.subr.bf16.mxu0 0
    %509 = vmatpush1.bf16.msra.mxu0 0
    %510 = vmatprep.subr.bf16.mxu0 0
    %511 = vmatpush1.bf16.msra.mxu0 0
    %512 = vmatprep.subr.bf16.mxu0 0
    %513 = vmatpush1.bf16.msra.mxu0 0
    %514 = vmatprep.subr.bf16.mxu0 0
    %515 = vmatpush1.bf16.msra.mxu0 0
    %516 = vmatprep.subr.bf16.mxu0 0
    %517 = vmatpush1.bf16.msra.mxu0 0
    %518 = vmatprep.subr.bf16.mxu0 0
    %519 = vmatpush1.bf16.msra.mxu0 0
    %520 = vmatprep.subr.bf16.mxu0 0
    %521 = vmatpush1.bf16.msra.mxu0 0
    %522 = vmatprep.subr.bf16.mxu0 0
    %523 = vmatpush1.bf16.msra.mxu0 0
    %524 = vmatprep.subr.bf16.mxu0 0
    %525 = vmatpush1.bf16.msra.mxu0 0
    %526 = vmatprep.mubr.bf16.mxu0 0
    %527 = vmatmul.mubr.bf16.gmra.mrb[0].mxu0 %v480
    %v528 = vpop.f32.mrb[0].mxu0
    %v529 = vadd.f32 0.0, %v528
    %v530 = vpop.f32.mrb[0].mxu0
    %v531 = vadd.f32 0.0, %v530
    %v532 = vpop.f32.mrb[0].mxu0
    %v533 = vadd.f32 0.0, %v532
    %v534 = vpop.f32.mrb[0].mxu0
    %v535 = vadd.f32 0.0, %v534
    %536 = vmatprep.mubr.bf16.mxu0 0
    %537 = vmatmul.mubr.bf16.gmra.mrb[0].mxu0 %v483
    %v538 = vpop.f32.mrb[0].mxu0
    %v539 = vadd.f32 0.0, %v538
    %v540 = vpop.f32.mrb[0].mxu0
    %v541 = vadd.f32 0.0, %v540
    %v542 = vpop.f32.mrb[0].mxu0
    %v543 = vadd.f32 0.0, %v542
    %v544 = vpop.f32.mrb[0].mxu0
    %v545 = vadd.f32 0.0, %v544
    %546 = vmatprep.mubr.bf16.mxu0 0
    %547 = vmatmul.mubr.bf16.gmra.mrb[0].mxu0 %v486
    %v548 = vpop.f32.mrb[0].mxu0
    %v549 = vadd.f32 0.0, %v548
    %v550 = vpop.f32.mrb[0].mxu0
    %v551 = vadd.f32 0.0, %v550
    %v552 = vpop.f32.mrb[0].mxu0
    %v553 = vadd.f32 0.0, %v552
    %v554 = vpop.f32.mrb[0].mxu0
    %v555 = vadd.f32 0.0, %v554
    %556 = vdwg.mxu0
    %v557 = vadd.f32 %v394, %v529
    %v558 = vadd.f32 %v396, %v531
    %v559 = vadd.f32 %v398, %v533
    %v560 = vadd.f32 %v400, %v535
    %v561 = vadd.f32 %v404, %v539
    %v562 = vadd.f32 %v406, %v541
    %v563 = vadd.f32 %v408, %v543
    %v564 = vadd.f32 %v410, %v545
    %v565 = vadd.f32 %v414, %v549
    %v566 = vadd.f32 %v416, %v551
    %v567 = vadd.f32 %v418, %v553
    %v568 = vadd.f32 %v420, %v555
    %vm569 = vsmask.f32 2304
    %vm570 = vsmask.f32 6416
    %vm571 = vmor %vm569, %vm570
    %v572 = vrot.slane %v132, 5
    %v573 = vrot.slane %v135, 6
    %v574 = vor.u32 %v572, %v573
    %v575 = vrot.slane %v574, 4
    %v576 = vrot.slane %v145, 5
    %v577 = vrot.slane %v141, 6
    %v578 = vor.u32 %v576, %v577
    %v579 = vsel %vm571, %v575, %v578
    %v580 = vrot.slane %v578, 4
    %v581 = vrot.slane %v155, 5
    %v582 = vrot.slane %v151, 6
    %v583 = vor.u32 %v581, %v582
    %v584 = vsel %vm571, %v580, %v583
    %v585 = vrot.slane %v583, 4
    %v586 = vshrl.u32 %v119, 16
    %v588 = vrot.slane %v586, 5
    %v589 = vrot.slane %v161, 6
    %v590 = vor.u32 %v588, %v589
    %v591 = vsel %vm571, %v585, %v590
    %v592 = vrot.slane %v166, 5
    %v593 = vrot.slane %v169, 6
    %v594 = vor.u32 %v592, %v593
    %v595 = vrot.slane %v594, 4
    %v596 = vrot.slane %v179, 5
    %v597 = vrot.slane %v175, 6
    %v598 = vor.u32 %v596, %v597
    %v599 = vsel %vm571, %v595, %v598
    %v600 = vrot.slane %v598, 4
    %v601 = vrot.slane %v189, 5
    %v602 = vrot.slane %v185, 6
    %v603 = vor.u32 %v601, %v602
    %v604 = vsel %vm571, %v600, %v603
    %v605 = vrot.slane %v603, 4
    %v606 = vshrl.u32 %v123, 16
    %v608 = vrot.slane %v606, 5
    %v609 = vrot.slane %v195, 6
    %v610 = vor.u32 %v608, %v609
    %v611 = vsel %vm571, %v605, %v610
    %s612 = scalar_lea.vmem [#allocation2], 96
    %v613 = vld [vmem:[%s612] sm:$0xff]
    %v614 = vld [vmem:[%s612 + $0x8] sm:$0xff]
    %v615 = vld [vmem:[%s612 + $0x10] sm:$0xff]
    %v616 = vld [vmem:[%s612 + $0x18] sm:$0x33]
    %v617 = vunpack.c.l.b16 %v579
    %v618 = vunpack.c.l.b16 %v584
    %v619 = vunpack.c.l.b16 %v591
    %v620 = vunpack.c.l.b16 %v599
    %v621 = vunpack.c.l.b16 %v604
    %v622 = vunpack.c.l.b16 %v611
    %v623 = vpack.c.b16 %v618, %v617
    %v624 = vpack.c.b16 %v620, %v619
    %v625 = vpack.c.b16 %v622, %v621
    %v630 = vunpack.c.l.b16 %v613
    %v631 = vunpack.c.h.b16 %v613
    %v632 = vunpack.c.l.b16 %v614
    %v633 = vunpack.c.h.b16 %v614
    %v634 = vunpack.c.l.b16 %v615
    %v635 = vunpack.c.h.b16 %v615
    %v636 = vunpack.c.l.b16 %v616
    %v637 = vunpack.c.h.b16 %v616
    %v638 = vpack.c.b16 %v632, %v630
    %v639 = vpack.c.b16 %v633, %v631
    %v640 = vpack.c.b16 %v636, %v634
    %v641 = vpack.c.b16 %v637, %v635
    %v645 = vsel %vm231, %v623, 0
    %v648 = vsel %vm231, %v624, 0
    %v651 = vsel %vm231, %v625, 0
    %v654 = vsel %vm241, %v640, 0
    %v657 = vsel %vm241, %v641, 0
    %659 = vmatprep.subr.bf16.mxu0 %v639
    %660 = vmatpush1.bf16.msra.mxu0 %v638
    %661 = vmatprep.subr.bf16.mxu0 %v657
    %662 = vmatpush1.bf16.msra.mxu0 %v654
    %663 = vmatprep.subr.bf16.mxu0 0
    %664 = vmatpush1.bf16.msra.mxu0 0
    %665 = vmatprep.subr.bf16.mxu0 0
    %666 = vmatpush1.bf16.msra.mxu0 0
    %667 = vmatprep.subr.bf16.mxu0 0
    %668 = vmatpush1.bf16.msra.mxu0 0
    %669 = vmatprep.subr.bf16.mxu0 0
    %670 = vmatpush1.bf16.msra.mxu0 0
    %671 = vmatprep.subr.bf16.mxu0 0
    %672 = vmatpush1.bf16.msra.mxu0 0
    %673 = vmatprep.subr.bf16.mxu0 0
    %674 = vmatpush1.bf16.msra.mxu0 0
    %675 = vmatprep.subr.bf16.mxu0 0
    %676 = vmatpush1.bf16.msra.mxu0 0
    %677 = vmatprep.subr.bf16.mxu0 0
    %678 = vmatpush1.bf16.msra.mxu0 0
    %679 = vmatprep.subr.bf16.mxu0 0
    %680 = vmatpush1.bf16.msra.mxu0 0
    %681 = vmatprep.subr.bf16.mxu0 0
    %682 = vmatpush1.bf16.msra.mxu0 0
    %683 = vmatprep.subr.bf16.mxu0 0
    %684 = vmatpush1.bf16.msra.mxu0 0
    %685 = vmatprep.subr.bf16.mxu0 0
    %686 = vmatpush1.bf16.msra.mxu0 0
    %687 = vmatprep.subr.bf16.mxu0 0
    %688 = vmatpush1.bf16.msra.mxu0 0
    %689 = vmatprep.subr.bf16.mxu0 0
    %690 = vmatpush1.bf16.msra.mxu0 0
    %691 = vmatprep.mubr.bf16.mxu0 0
    %692 = vmatmul.mubr.bf16.gmra.mrb[0].mxu0 %v645
    %v693 = vpop.f32.mrb[0].mxu0
    %v694 = vadd.f32 0.0, %v693
    %v695 = vpop.f32.mrb[0].mxu0
    %v696 = vadd.f32 0.0, %v695
    %v697 = vpop.f32.mrb[0].mxu0
    %v698 = vadd.f32 0.0, %v697
    %v699 = vpop.f32.mrb[0].mxu0
    %v700 = vadd.f32 0.0, %v699
    %701 = vmatprep.mubr.bf16.mxu0 0
    %702 = vmatmul.mubr.bf16.gmra.mrb[0].mxu0 %v648
    %v703 = vpop.f32.mrb[0].mxu0
    %v704 = vadd.f32 0.0, %v703
    %v705 = vpop.f32.mrb[0].mxu0
    %v706 = vadd.f32 0.0, %v705
    %v707 = vpop.f32.mrb[0].mxu0
    %v708 = vadd.f32 0.0, %v707
    %v709 = vpop.f32.mrb[0].mxu0
    %v710 = vadd.f32 0.0, %v709
    %711 = vmatprep.mubr.bf16.mxu0 0
    %712 = vmatmul.mubr.bf16.gmra.mrb[0].mxu0 %v651
    %v713 = vpop.f32.mrb[0].mxu0
    %v714 = vadd.f32 0.0, %v713
    %v715 = vpop.f32.mrb[0].mxu0
    %v716 = vadd.f32 0.0, %v715
    %v717 = vpop.f32.mrb[0].mxu0
    %v718 = vadd.f32 0.0, %v717
    %v719 = vpop.f32.mrb[0].mxu0
    %v720 = vadd.f32 0.0, %v719
    %721 = vdwg.mxu0
    %v722 = vadd.f32 %v557, %v694
    %v723 = vadd.f32 %v558, %v696
    %v724 = vadd.f32 %v559, %v698
    %v725 = vadd.f32 %v560, %v700
    %v726 = vadd.f32 %v561, %v704
    %v727 = vadd.f32 %v562, %v706
    %v728 = vadd.f32 %v563, %v708
    %v729 = vadd.f32 %v564, %v710
    %v730 = vadd.f32 %v565, %v714
    %v731 = vadd.f32 %v566, %v716
    %v732 = vadd.f32 %v567, %v718
    %v733 = vadd.f32 %v568, %v720
    %vm734 = vcmask 1041408
    %vm735 = vcmask 1045508
    %vm736 = vmor %vm734, %vm735
    %v737 = vrot.slane %v116, 6
    %v738 = vrot.slane %v737, 4
    %v739 = vrot.slane %v117, 6
    %v740 = vsel %vm736, %v738, %v739
    %v741 = vrot.slane %v739, 4
    %v742 = vrot.slane %v118, 6
    %v743 = vsel %vm736, %v741, %v742
    %v744 = vrot.slane %v742, 4
    %v745 = vrot.slane %v119, 6
    %v746 = vsel %vm736, %v744, %v745
    %v747 = vrot.slane %v120, 6
    %v748 = vrot.slane %v747, 4
    %v749 = vrot.slane %v121, 6
    %v750 = vsel %vm736, %v748, %v749
    %v751 = vrot.slane %v749, 4
    %v752 = vrot.slane %v122, 6
    %v753 = vsel %vm736, %v751, %v752
    %v754 = vrot.slane %v752, 4
    %v755 = vrot.slane %v123, 6
    %v756 = vsel %vm736, %v754, %v755
    %s757 = scalar_lea.vmem [#allocation2], 128
    %v758 = vld [vmem:[%s757] sm:$0xff]
    %v759 = vld [vmem:[%s757 + $0x8] sm:$0xff]
    %v760 = vld [vmem:[%s757 + $0x10] sm:$0xff]
    %v761 = vld [vmem:[%s757 + $0x18] sm:$0x33]
    %v762 = vunpack.c.l.b16 %v740
    %v763 = vunpack.c.l.b16 %v743
    %v764 = vunpack.c.l.b16 %v746
    %v765 = vunpack.c.l.b16 %v750
    %v766 = vunpack.c.l.b16 %v753
    %v767 = vunpack.c.l.b16 %v756
    %v768 = vpack.c.b16 %v763, %v762
    %v769 = vpack.c.b16 %v765, %v764
    %v770 = vpack.c.b16 %v767, %v766
    %v775 = vunpack.c.l.b16 %v758
    %v776 = vunpack.c.h.b16 %v758
    %v777 = vunpack.c.l.b16 %v759
    %v778 = vunpack.c.h.b16 %v759
    %v779 = vunpack.c.l.b16 %v760
    %v780 = vunpack.c.h.b16 %v760
    %v781 = vunpack.c.l.b16 %v761
    %v782 = vunpack.c.h.b16 %v761
    %v783 = vpack.c.b16 %v777, %v775
    %v784 = vpack.c.b16 %v778, %v776
    %v785 = vpack.c.b16 %v781, %v779
    %v786 = vpack.c.b16 %v782, %v780
    %v790 = vsel %vm231, %v768, 0
    %v793 = vsel %vm231, %v769, 0
    %v796 = vsel %vm231, %v770, 0
    %v799 = vsel %vm241, %v785, 0
    %v802 = vsel %vm241, %v786, 0
    %804 = vmatprep.subr.bf16.mxu0 %v784
    %805 = vmatpush1.bf16.msra.mxu0 %v783
    %806 = vmatprep.subr.bf16.mxu0 %v802
    %807 = vmatpush1.bf16.msra.mxu0 %v799
    %808 = vmatprep.subr.bf16.mxu0 0
    %809 = vmatpush1.bf16.msra.mxu0 0
    %810 = vmatprep.subr.bf16.mxu0 0
    %811 = vmatpush1.bf16.msra.mxu0 0
    %812 = vmatprep.subr.bf16.mxu0 0
    %813 = vmatpush1.bf16.msra.mxu0 0
    %814 = vmatprep.subr.bf16.mxu0 0
    %815 = vmatpush1.bf16.msra.mxu0 0
    %816 = vmatprep.subr.bf16.mxu0 0
    %817 = vmatpush1.bf16.msra.mxu0 0
    %818 = vmatprep.subr.bf16.mxu0 0
    %819 = vmatpush1.bf16.msra.mxu0 0
    %820 = vmatprep.subr.bf16.mxu0 0
    %821 = vmatpush1.bf16.msra.mxu0 0
    %822 = vmatprep.subr.bf16.mxu0 0
    %823 = vmatpush1.bf16.msra.mxu0 0
    %824 = vmatprep.subr.bf16.mxu0 0
    %825 = vmatpush1.bf16.msra.mxu0 0
    %826 = vmatprep.subr.bf16.mxu0 0
    %827 = vmatpush1.bf16.msra.mxu0 0
    %828 = vmatprep.subr.bf16.mxu0 0
    %829 = vmatpush1.bf16.msra.mxu0 0
    %830 = vmatprep.subr.bf16.mxu0 0
    %831 = vmatpush1.bf16.msra.mxu0 0
    %832 = vmatprep.subr.bf16.mxu0 0
    %833 = vmatpush1.bf16.msra.mxu0 0
    %834 = vmatprep.subr.bf16.mxu0 0
    %835 = vmatpush1.bf16.msra.mxu0 0
    %836 = vmatprep.mubr.bf16.mxu0 0
    %837 = vmatmul.mubr.bf16.gmra.mrb[0].mxu0 %v790
    %v838 = vpop.f32.mrb[0].mxu0
    %v839 = vadd.f32 0.0, %v838
    %v840 = vpop.f32.mrb[0].mxu0
    %v841 = vadd.f32 0.0, %v840
    %v842 = vpop.f32.mrb[0].mxu0
    %v843 = vadd.f32 0.0, %v842
    %v844 = vpop.f32.mrb[0].mxu0
    %v845 = vadd.f32 0.0, %v844
    %846 = vmatprep.mubr.bf16.mxu0 0
    %847 = vmatmul.mubr.bf16.gmra.mrb[0].mxu0 %v793
    %v848 = vpop.f32.mrb[0].mxu0
    %v849 = vadd.f32 0.0, %v848
    %v850 = vpop.f32.mrb[0].mxu0
    %v851 = vadd.f32 0.0, %v850
    %v852 = vpop.f32.mrb[0].mxu0
    %v853 = vadd.f32 0.0, %v852
    %v854 = vpop.f32.mrb[0].mxu0
    %v855 = vadd.f32 0.0, %v854
    %856 = vmatprep.mubr.bf16.mxu0 0
    %857 = vmatmul.mubr.bf16.gmra.mrb[0].mxu0 %v796
    %v858 = vpop.f32.mrb[0].mxu0
    %v859 = vadd.f32 0.0, %v858
    %v860 = vpop.f32.mrb[0].mxu0
    %v861 = vadd.f32 0.0, %v860
    %v862 = vpop.f32.mrb[0].mxu0
    %v863 = vadd.f32 0.0, %v862
    %v864 = vpop.f32.mrb[0].mxu0
    %v865 = vadd.f32 0.0, %v864
    %866 = vdwg.mxu0
    %v867 = vadd.f32 %v722, %v839
    %v868 = vadd.f32 %v723, %v841
    %v869 = vadd.f32 %v724, %v843
    %v870 = vadd.f32 %v725, %v845
    %v871 = vadd.f32 %v726, %v849
    %v872 = vadd.f32 %v727, %v851
    %v873 = vadd.f32 %v728, %v853
    %v874 = vadd.f32 %v729, %v855
    %v875 = vadd.f32 %v730, %v859
    %v876 = vadd.f32 %v731, %v861
    %v877 = vadd.f32 %v732, %v863
    %v878 = vadd.f32 %v733, %v865
    %v879 = vld [vmem:[%s2] sm:$0x3]
    %v881 = vlaneseq
    %v882 = vshrl.u32 %v881, 7
    %v883 = vsub.s32 0, %v882
    %v884 = vrot.slane %v879, %v883
    %v885 = vlaneseq
    %v886 = vshrl.u32 %v885, 7
    %v887 = vsub.s32 1, %v886
    %v888 = vrot.slane %v879, %v887
    %v891 = vadd.f32 %v867, %v884
    %v892 = vadd.f32 %v868, %v888
    %v893 = vadd.f32 %v869, %v884
    %v894 = vadd.f32 %v870, %v888
    %v895 = vadd.f32 %v871, %v884
    %v896 = vadd.f32 %v872, %v888
    %v897 = vadd.f32 %v873, %v884
    %v898 = vadd.f32 %v874, %v888
    %v899 = vadd.f32 %v875, %v884
    %v900 = vadd.f32 %v876, %v888
    %v901 = vadd.f32 %v877, %v884
    %v902 = vadd.f32 %v878, %v888
    %v903 = vmax.f32 %v891, 0.0
    %v904 = vmax.f32 %v892, 0.0
    %v905 = vmax.f32 %v893, 0.0
    %v906 = vmax.f32 %v894, 0.0
    %v907 = vmax.f32 %v895, 0.0
    %v908 = vmax.f32 %v896, 0.0
    %v909 = vmax.f32 %v897, 0.0
    %v910 = vmax.f32 %v898, 0.0
    %v911 = vmax.f32 %v899, 0.0
    %v912 = vmax.f32 %v900, 0.0
    %v913 = vmax.f32 %v901, 0.0
    %v914 = vmax.f32 %v902, 0.0
    %927 = vrot.lane.b32.xlu0 %v903, 56
    %v928 = vpop.permute.xlu0 %927
    %929 = vrot.lane.b32.xlu0 %v904, 56
    %v930 = vpop.permute.xlu0 %929
    %931 = vrot.lane.b32.xlu0 %v905, 56
    %v932 = vpop.permute.xlu0 %931
    %933 = vrot.lane.b32.xlu0 %v906, 56
    %v934 = vpop.permute.xlu0 %933
    %935 = vrot.lane.b32.xlu0 %v907, 56
    %v936 = vpop.permute.xlu0 %935
    %937 = vrot.lane.b32.xlu0 %v908, 56
    %v938 = vpop.permute.xlu0 %937
    %939 = vrot.lane.b32.xlu0 %v909, 56
    %v940 = vpop.permute.xlu0 %939
    %941 = vrot.lane.b32.xlu0 %v910, 56
    %v942 = vpop.permute.xlu0 %941
    %943 = vrot.lane.b32.xlu0 %v911, 56
    %v944 = vpop.permute.xlu0 %943
    %945 = vrot.lane.b32.xlu0 %v912, 56
    %v946 = vpop.permute.xlu0 %945
    %947 = vrot.lane.b32.xlu0 %v913, 56
    %v948 = vpop.permute.xlu0 %947
    %949 = vrot.lane.b32.xlu0 %v914, 56
    %v950 = vpop.permute.xlu0 %949
    %vm951 = vcmask 457728
    %v952 = vsel %vm951, %v928, %v930
    %v953 = vsel %vm951, %v932, %v934
    %v954 = vsel %vm951, %v936, %v938
    %v955 = vsel %vm951, %v940, %v942
    %v956 = vsel %vm951, %v944, %v946
    %v957 = vsel %vm951, %v948, %v950
    %v964 = vmax.f32 %v903, %v952
    %v965 = vmax.f32 %v905, %v953
    %v966 = vmax.f32 %v907, %v954
    %v967 = vmax.f32 %v909, %v955
    %v968 = vmax.f32 %v911, %v956
    %v969 = vmax.f32 %v913, %v957
    %v976 = vcombine.high %v964, %v964
    %v978 = vunpack.c.l.s4 1983009808
    %v979 = vunpack.c.0.s8 %v978
    %v980 = vlaneseq
    %v981 = vshrl.u32 %v980, 7
    %v982 = vsub.s32 %v979, %v981
    %v983 = vrot.slane %v964, %v982
    %v985 = vunpack.c.l.s4 1983009808
    %v986 = vunpack.c.0.s8 %v985
    %v987 = vlaneseq
    %v988 = vshrl.u32 %v987, 7
    %v989 = vsub.s32 %v986, %v988
    %v990 = vrot.slane %v976, %v989
    %v991 = vcombine.high %v983, %v983
    %v992 = vcombine.high %v990, %v990
    %v993 = vcombine.high %v965, %v965
    %v995 = vunpack.c.l.s4 1983009808
    %v996 = vunpack.c.0.s8 %v995
    %v997 = vlaneseq
    %v998 = vshrl.u32 %v997, 7
    %v999 = vsub.s32 %v996, %v998
    %v1000 = vrot.slane %v965, %v999
    %v1002 = vunpack.c.l.s4 1983009808
    %v1003 = vunpack.c.0.s8 %v1002
    %v1004 = vlaneseq
    %v1005 = vshrl.u32 %v1004, 7
    %v1006 = vsub.s32 %v1003, %v1005
    %v1007 = vrot.slane %v993, %v1006
    %v1008 = vcombine.high %v1000, %v1000
    %v1009 = vcombine.high %v1007, %v1007
    %v1010 = vcombine.high %v966, %v966
    %v1012 = vunpack.c.l.s4 1983009808
    %v1013 = vunpack.c.0.s8 %v1012
    %v1014 = vlaneseq
    %v1015 = vshrl.u32 %v1014, 7
    %v1016 = vsub.s32 %v1013, %v1015
    %v1017 = vrot.slane %v966, %v1016
    %v1019 = vunpack.c.l.s4 1983009808
    %v1020 = vunpack.c.0.s8 %v1019
    %v1021 = vlaneseq
    %v1022 = vshrl.u32 %v1021, 7
    %v1023 = vsub.s32 %v1020, %v1022
    %v1024 = vrot.slane %v1010, %v1023
    %v1025 = vcombine.high %v1017, %v1017
    %v1026 = vcombine.high %v1024, %v1024
    %v1027 = vcombine.high %v967, %v967
    %v1029 = vunpack.c.l.s4 1983009808
    %v1030 = vunpack.c.0.s8 %v1029
    %v1031 = vlaneseq
    %v1032 = vshrl.u32 %v1031, 7
    %v1033 = vsub.s32 %v1030, %v1032
    %v1034 = vrot.slane %v967, %v1033
    %v1036 = vunpack.c.l.s4 1983009808
    %v1037 = vunpack.c.0.s8 %v1036
    %v1038 = vlaneseq
    %v1039 = vshrl.u32 %v1038, 7
    %v1040 = vsub.s32 %v1037, %v1039
    %v1041 = vrot.slane %v1027, %v1040
    %v1042 = vcombine.high %v1034, %v1034
    %v1043 = vcombine.high %v1041, %v1041
    %v1044 = vcombine.high %v968, %v968
    %v1046 = vunpack.c.l.s4 1983009808
    %v1047 = vunpack.c.0.s8 %v1046
    %v1048 = vlaneseq
    %v1049 = vshrl.u32 %v1048, 7
    %v1050 = vsub.s32 %v1047, %v1049
    %v1051 = vrot.slane %v968, %v1050
    %v1053 = vunpack.c.l.s4 1983009808
    %v1054 = vunpack.c.0.s8 %v1053
    %v1055 = vlaneseq
    %v1056 = vshrl.u32 %v1055, 7
    %v1057 = vsub.s32 %v1054, %v1056
    %v1058 = vrot.slane %v1044, %v1057
    %v1059 = vcombine.high %v1051, %v1051
    %v1060 = vcombine.high %v1058, %v1058
    %v1061 = vcombine.high %v969, %v969
    %v1063 = vunpack.c.l.s4 1983009808
    %v1064 = vunpack.c.0.s8 %v1063
    %v1065 = vlaneseq
    %v1066 = vshrl.u32 %v1065, 7
    %v1067 = vsub.s32 %v1064, %v1066
    %v1068 = vrot.slane %v969, %v1067
    %v1070 = vunpack.c.l.s4 1983009808
    %v1071 = vunpack.c.0.s8 %v1070
    %v1072 = vlaneseq
    %v1073 = vshrl.u32 %v1072, 7
    %v1074 = vsub.s32 %v1071, %v1073
    %v1075 = vrot.slane %v1061, %v1074
    %v1076 = vcombine.high %v1068, %v1068
    %v1077 = vcombine.high %v1075, %v1075
    %vm1102 = vcmask 582656
    %v1103 = vsel %vm1102, %v983, -inf
    %v1104 = vrot.slane %v1103, 4
    %v1105 = vmax.f32 %v1103, %v1104
    %v1106 = vrot.slane %v1105, 2
    %v1107 = vmax.f32 %v1105, %v1106
    %v1108 = vrot.slane %v1107, 1
    %v1109 = vmax.f32 %v1107, %v1108
    %v1110 = vsel %vm1102, %v991, -inf
    %v1111 = vrot.slane %v1110, 4
    %v1112 = vmax.f32 %v1110, %v1111
    %v1113 = vrot.slane %v1112, 2
    %v1114 = vmax.f32 %v1112, %v1113
    %v1115 = vrot.slane %v1114, 1
    %v1116 = vmax.f32 %v1114, %v1115
    %v1117 = vsel %vm1102, %v990, -inf
    %v1118 = vrot.slane %v1117, 4
    %v1119 = vmax.f32 %v1117, %v1118
    %v1120 = vrot.slane %v1119, 2
    %v1121 = vmax.f32 %v1119, %v1120
    %v1122 = vrot.slane %v1121, 1
    %v1123 = vmax.f32 %v1121, %v1122
    %v1124 = vsel %vm1102, %v992, -inf
    %v1125 = vrot.slane %v1124, 4
    %v1126 = vmax.f32 %v1124, %v1125
    %v1127 = vrot.slane %v1126, 2
    %v1128 = vmax.f32 %v1126, %v1127
    %v1129 = vrot.slane %v1128, 1
    %v1130 = vmax.f32 %v1128, %v1129
    %v1131 = vsel %vm1102, %v1000, -inf
    %v1132 = vrot.slane %v1131, 4
    %v1133 = vmax.f32 %v1131, %v1132
    %v1134 = vrot.slane %v1133, 2
    %v1135 = vmax.f32 %v1133, %v1134
    %v1136 = vrot.slane %v1135, 1
    %v1137 = vmax.f32 %v1135, %v1136
    %v1138 = vsel %vm1102, %v1008, -inf
    %v1139 = vrot.slane %v1138, 4
    %v1140 = vmax.f32 %v1138, %v1139
    %v1141 = vrot.slane %v1140, 2
    %v1142 = vmax.f32 %v1140, %v1141
    %v1143 = vrot.slane %v1142, 1
    %v1144 = vmax.f32 %v1142, %v1143
    %v1145 = vsel %vm1102, %v1007, -inf
    %v1146 = vrot.slane %v1145, 4
    %v1147 = vmax.f32 %v1145, %v1146
    %v1148 = vrot.slane %v1147, 2
    %v1149 = vmax.f32 %v1147, %v1148
    %v1150 = vrot.slane %v1149, 1
    %v1151 = vmax.f32 %v1149, %v1150
    %v1152 = vsel %vm1102, %v1009, -inf
    %v1153 = vrot.slane %v1152, 4
    %v1154 = vmax.f32 %v1152, %v1153
    %v1155 = vrot.slane %v1154, 2
    %v1156 = vmax.f32 %v1154, %v1155
    %v1157 = vrot.slane %v1156, 1
    %v1158 = vmax.f32 %v1156, %v1157
    %v1159 = vsel %vm1102, %v1017, -inf
    %v1160 = vrot.slane %v1159, 4
    %v1161 = vmax.f32 %v1159, %v1160
    %v1162 = vrot.slane %v1161, 2
    %v1163 = vmax.f32 %v1161, %v1162
    %v1164 = vrot.slane %v1163, 1
    %v1165 = vmax.f32 %v1163, %v1164
    %v1166 = vsel %vm1102, %v1025, -inf
    %v1167 = vrot.slane %v1166, 4
    %v1168 = vmax.f32 %v1166, %v1167
    %v1169 = vrot.slane %v1168, 2
    %v1170 = vmax.f32 %v1168, %v1169
    %v1171 = vrot.slane %v1170, 1
    %v1172 = vmax.f32 %v1170, %v1171
    %v1173 = vsel %vm1102, %v1024, -inf
    %v1174 = vrot.slane %v1173, 4
    %v1175 = vmax.f32 %v1173, %v1174
    %v1176 = vrot.slane %v1175, 2
    %v1177 = vmax.f32 %v1175, %v1176
    %v1178 = vrot.slane %v1177, 1
    %v1179 = vmax.f32 %v1177, %v1178
    %v1180 = vsel %vm1102, %v1026, -inf
    %v1181 = vrot.slane %v1180, 4
    %v1182 = vmax.f32 %v1180, %v1181
    %v1183 = vrot.slane %v1182, 2
    %v1184 = vmax.f32 %v1182, %v1183
    %v1185 = vrot.slane %v1184, 1
    %v1186 = vmax.f32 %v1184, %v1185
    %v1187 = vsel %vm1102, %v1034, -inf
    %v1188 = vrot.slane %v1187, 4
    %v1189 = vmax.f32 %v1187, %v1188
    %v1190 = vrot.slane %v1189, 2
    %v1191 = vmax.f32 %v1189, %v1190
    %v1192 = vrot.slane %v1191, 1
    %v1193 = vmax.f32 %v1191, %v1192
    %v1194 = vsel %vm1102, %v1042, -inf
    %v1195 = vrot.slane %v1194, 4
    %v1196 = vmax.f32 %v1194, %v1195
    %v1197 = vrot.slane %v1196, 2
    %v1198 = vmax.f32 %v1196, %v1197
    %v1199 = vrot.slane %v1198, 1
    %v1200 = vmax.f32 %v1198, %v1199
    %v1201 = vsel %vm1102, %v1041, -inf
    %v1202 = vrot.slane %v1201, 4
    %v1203 = vmax.f32 %v1201, %v1202
    %v1204 = vrot.slane %v1203, 2
    %v1205 = vmax.f32 %v1203, %v1204
    %v1206 = vrot.slane %v1205, 1
    %v1207 = vmax.f32 %v1205, %v1206
    %v1208 = vsel %vm1102, %v1043, -inf
    %v1209 = vrot.slane %v1208, 4
    %v1210 = vmax.f32 %v1208, %v1209
    %v1211 = vrot.slane %v1210, 2
    %v1212 = vmax.f32 %v1210, %v1211
    %v1213 = vrot.slane %v1212, 1
    %v1214 = vmax.f32 %v1212, %v1213
    %v1215 = vsel %vm1102, %v1051, -inf
    %v1216 = vrot.slane %v1215, 4
    %v1217 = vmax.f32 %v1215, %v1216
    %v1218 = vrot.slane %v1217, 2
    %v1219 = vmax.f32 %v1217, %v1218
    %v1220 = vrot.slane %v1219, 1
    %v1221 = vmax.f32 %v1219, %v1220
    %v1222 = vsel %vm1102, %v1059, -inf
    %v1223 = vrot.slane %v1222, 4
    %v1224 = vmax.f32 %v1222, %v1223
    %v1225 = vrot.slane %v1224, 2
    %v1226 = vmax.f32 %v1224, %v1225
    %v1227 = vrot.slane %v1226, 1
    %v1228 = vmax.f32 %v1226, %v1227
    %v1229 = vsel %vm1102, %v1058, -inf
    %v1230 = vrot.slane %v1229, 4
    %v1231 = vmax.f32 %v1229, %v1230
    %v1232 = vrot.slane %v1231, 2
    %v1233 = vmax.f32 %v1231, %v1232
    %v1234 = vrot.slane %v1233, 1
    %v1235 = vmax.f32 %v1233, %v1234
    %v1236 = vsel %vm1102, %v1060, -inf
    %v1237 = vrot.slane %v1236, 4
    %v1238 = vmax.f32 %v1236, %v1237
    %v1239 = vrot.slane %v1238, 2
    %v1240 = vmax.f32 %v1238, %v1239
    %v1241 = vrot.slane %v1240, 1
    %v1242 = vmax.f32 %v1240, %v1241
    %v1243 = vsel %vm1102, %v1068, -inf
    %v1244 = vrot.slane %v1243, 4
    %v1245 = vmax.f32 %v1243, %v1244
    %v1246 = vrot.slane %v1245, 2
    %v1247 = vmax.f32 %v1245, %v1246
    %v1248 = vrot.slane %v1247, 1
    %v1249 = vmax.f32 %v1247, %v1248
    %v1250 = vsel %vm1102, %v1076, -inf
    %v1251 = vrot.slane %v1250, 4
    %v1252 = vmax.f32 %v1250, %v1251
    %v1253 = vrot.slane %v1252, 2
    %v1254 = vmax.f32 %v1252, %v1253
    %v1255 = vrot.slane %v1254, 1
    %v1256 = vmax.f32 %v1254, %v1255
    %v1257 = vsel %vm1102, %v1075, -inf
    %v1258 = vrot.slane %v1257, 4
    %v1259 = vmax.f32 %v1257, %v1258
    %v1260 = vrot.slane %v1259, 2
    %v1261 = vmax.f32 %v1259, %v1260
    %v1262 = vrot.slane %v1261, 1
    %v1263 = vmax.f32 %v1261, %v1262
    %v1264 = vsel %vm1102, %v1077, -inf
    %v1265 = vrot.slane %v1264, 4
    %v1266 = vmax.f32 %v1264, %v1265
    %v1267 = vrot.slane %v1266, 2
    %v1268 = vmax.f32 %v1266, %v1267
    %v1269 = vrot.slane %v1268, 1
    %v1270 = vmax.f32 %v1268, %v1269
    %v1271 = vpack.c.bf16 %v1109, %v1109
    %v1272 = vpack.c.bf16 %v1116, %v1116
    %v1273 = vpack.c.bf16 %v1123, %v1123
    %v1274 = vpack.c.bf16 %v1130, %v1130
    %v1275 = vpack.c.bf16 %v1137, %v1137
    %v1276 = vpack.c.bf16 %v1144, %v1144
    %v1277 = vpack.c.bf16 %v1151, %v1151
    %v1278 = vpack.c.bf16 %v1158, %v1158
    %v1279 = vpack.c.bf16 %v1165, %v1165
    %v1280 = vpack.c.bf16 %v1172, %v1172
    %v1281 = vpack.c.bf16 %v1179, %v1179
    %v1282 = vpack.c.bf16 %v1186, %v1186
    %v1283 = vpack.c.bf16 %v1193, %v1193
    %v1284 = vpack.c.bf16 %v1200, %v1200
    %v1285 = vpack.c.bf16 %v1207, %v1207
    %v1286 = vpack.c.bf16 %v1214, %v1214
    %v1287 = vpack.c.bf16 %v1221, %v1221
    %v1288 = vpack.c.bf16 %v1228, %v1228
    %v1289 = vpack.c.bf16 %v1235, %v1235
    %v1290 = vpack.c.bf16 %v1242, %v1242
    %v1291 = vpack.c.bf16 %v1249, %v1249
    %v1292 = vpack.c.bf16 %v1256, %v1256
    %v1293 = vpack.c.bf16 %v1263, %v1263
    %v1294 = vpack.c.bf16 %v1270, %v1270
    %v1295 = vld [vmem:[%s3] sm:$0xf]
    %v1296 = vld [vmem:[%s3 + $0x4] sm:$0xf]
    %v1297 = vld [vmem:[%s3 + $0x8] sm:$0xf]
    %v1298 = vld [vmem:[%s3 + $0xc] sm:$0xf]
    %v1299 = vld [vmem:[%s3 + $0x10] sm:$0xf]
    %v1300 = vld [vmem:[%s3 + $0x14] sm:$0xf]
    %v1301 = vld [vmem:[%s3 + $0x18] sm:$0xf]
    %v1302 = vld [vmem:[%s3 + $0x1c] sm:$0xf]
    %v1303 = vld [vmem:[%s3 + $0x20] sm:$0xf]
    %s1304 = scalar_lea.vmem %s3, 36
    %v1305 = vld [vmem:[%s1304] sm:$0xf]
    %v1306 = vld [vmem:[%s1304 + $0x4] sm:$0xf]
    %v1307 = vld [vmem:[%s1304 + $0x8] sm:$0xf]
    %v1308 = vld [vmem:[%s1304 + $0xc] sm:$0xf]
    %v1309 = vld [vmem:[%s1304 + $0x10] sm:$0xf]
    %v1310 = vld [vmem:[%s1304 + $0x14] sm:$0xf]
    %v1311 = vld [vmem:[%s1304 + $0x18] sm:$0xf]
    %v1312 = vld [vmem:[%s1304 + $0x1c] sm:$0xf]
    %v1313 = vld [vmem:[%s1304 + $0x20] sm:$0xf]
    %v1330 = vunpack.c.l.b16 %v1272
    %v1331 = vunpack.c.l.b16 %v1273
    %v1332 = vunpack.c.l.b16 %v1274
    %v1333 = vunpack.c.l.b16 %v1275
    %v1334 = vunpack.c.l.b16 %v1276
    %v1335 = vunpack.c.l.b16 %v1277
    %v1336 = vunpack.c.l.b16 %v1278
    %v1337 = vunpack.c.l.b16 %v1279
    %v1338 = vunpack.c.l.b16 %v1284
    %v1339 = vunpack.c.l.b16 %v1285
    %v1340 = vunpack.c.l.b16 %v1286
    %v1341 = vunpack.c.l.b16 %v1287
    %v1342 = vunpack.c.l.b16 %v1288
    %v1343 = vunpack.c.l.b16 %v1289
    %v1344 = vunpack.c.l.b16 %v1290
    %v1345 = vunpack.c.l.b16 %v1291
    %vm1346 = vcmask 1041409
    %v1347 = vsel %vm1346, %v1331, %v1330
    %vm1348 = vcmask 1042434
    %v1349 = vsel %vm1348, %v1332, %v1347
    %vm1350 = vcmask 1043459
    %v1351 = vsel %vm1350, %v1333, %v1349
    %vm1352 = vcmask 1044484
    %v1353 = vsel %vm1352, %v1334, %v1351
    %vm1354 = vcmask 1045509
    %v1355 = vsel %vm1354, %v1335, %v1353
    %vm1356 = vcmask 1046534
    %v1357 = vsel %vm1356, %v1336, %v1355
    %vm1358 = vcmask 1047559
    %v1359 = vsel %vm1358, %v1337, %v1357
    %v1360 = vsel %vm1346, %v1339, %v1338
    %v1361 = vsel %vm1348, %v1340, %v1360
    %v1362 = vsel %vm1350, %v1341, %v1361
    %v1363 = vsel %vm1352, %v1342, %v1362
    %v1364 = vsel %vm1354, %v1343, %v1363
    %v1365 = vsel %vm1356, %v1344, %v1364
    %v1366 = vsel %vm1358, %v1345, %v1365
    %v1367 = vpack.c.b16 %v1366, %v1359
    %v1377 = vunpack.c.l.b16 %v1305
    %v1378 = vunpack.c.l.b16 %v1306
    %v1379 = vunpack.c.l.b16 %v1307
    %v1380 = vunpack.c.l.b16 %v1308
    %v1381 = vunpack.c.l.b16 %v1309
    %v1382 = vunpack.c.l.b16 %v1310
    %v1383 = vunpack.c.l.b16 %v1311
    %v1384 = vunpack.c.l.b16 %v1312
    %v1385 = vunpack.c.l.b16 %v1313
    %v1386 = vpack.c.b16 %v1378, %v1377
    %v1387 = vpack.c.b16 %v1380, %v1379
    %v1388 = vpack.c.b16 %v1382, %v1381
    %v1389 = vpack.c.b16 %v1384, %v1383
    %v1390 = vpack.c.b16 %v1385, %v1385
    %vm1395 = vcmask 588800
    %v1397 = vsel %vm1395, %v1367, 0
    %vm1399 = vcmask 1043456
    %v1401 = vsel %vm1399, %v1390, 0
    %1403 = vmatprep.subr.bf16.mxu0 0
    %1404 = vmatpush1.bf16.msra.mxu0 %v1386
    %1405 = vmatprep.subr.bf16.mxu0 0
    %1406 = vmatpush1.bf16.msra.mxu0 %v1387
    %1407 = vmatprep.subr.bf16.mxu0 0
    %1408 = vmatpush1.bf16.msra.mxu0 %v1388
    %1409 = vmatprep.subr.bf16.mxu0 0
    %1410 = vmatpush1.bf16.msra.mxu0 %v1389
    %1411 = vmatprep.subr.bf16.mxu0 0
    %1412 = vmatpush1.bf16.msra.mxu0 %v1401
    %1413 = vmatprep.subr.bf16.mxu0 0
    %1414 = vmatpush1.bf16.msra.mxu0 0
    %1415 = vmatprep.subr.bf16.mxu0 0
    %1416 = vmatpush1.bf16.msra.mxu0 0
    %1417 = vmatprep.subr.bf16.mxu0 0
    %1418 = vmatpush1.bf16.msra.mxu0 0
    %1419 = vmatprep.subr.bf16.mxu0 0
    %1420 = vmatpush1.bf16.msra.mxu0 0
    %1421 = vmatprep.subr.bf16.mxu0 0
    %1422 = vmatpush1.bf16.msra.mxu0 0
    %1423 = vmatprep.subr.bf16.mxu0 0
    %1424 = vmatpush1.bf16.msra.mxu0 0
    %1425 = vmatprep.subr.bf16.mxu0 0
    %1426 = vmatpush1.bf16.msra.mxu0 0
    %1427 = vmatprep.subr.bf16.mxu0 0
    %1428 = vmatpush1.bf16.msra.mxu0 0
    %1429 = vmatprep.subr.bf16.mxu0 0
    %1430 = vmatpush1.bf16.msra.mxu0 0
    %1431 = vmatprep.subr.bf16.mxu0 0
    %1432 = vmatpush1.bf16.msra.mxu0 0
    %1433 = vmatprep.subr.bf16.mxu0 0
    %1434 = vmatpush1.bf16.msra.mxu0 0
    %1435 = vmatprep.mubr.bf16.mxu0 0
    %1436 = vmatmul.mubr.bf16.gmra.mrb[0].mxu0 %v1397
    %v1437 = vpop.f32.mrb[0].mxu0
    %v1438 = vadd.f32 0.0, %v1437
    %v1439 = vpop.f32.mrb[0].mxu0
    %v1440 = vpop.f32.mrb[0].mxu0
    %v1441 = vadd.f32 0.0, %v1440
    %v1442 = vpop.f32.mrb[0].mxu0
    %1443 = vdwg.mxu0
    %v1446 = vunpack.c.l.b16 %v1271
    %v1447 = vunpack.c.l.b16 %v1283
    %v1448 = vsel %vm1346, %v1330, %v1446
    %v1449 = vsel %vm1348, %v1331, %v1448
    %v1450 = vsel %vm1350, %v1332, %v1449
    %v1451 = vsel %vm1352, %v1333, %v1450
    %v1452 = vsel %vm1354, %v1334, %v1451
    %v1453 = vsel %vm1356, %v1335, %v1452
    %v1454 = vsel %vm1358, %v1336, %v1453
    %v1455 = vsel %vm1346, %v1338, %v1447
    %v1456 = vsel %vm1348, %v1339, %v1455
    %v1457 = vsel %vm1350, %v1340, %v1456
    %v1458 = vsel %vm1352, %v1341, %v1457
    %v1459 = vsel %vm1354, %v1342, %v1458
    %v1460 = vsel %vm1356, %v1343, %v1459
    %v1461 = vsel %vm1358, %v1344, %v1460
    %v1462 = vpack.c.b16 %v1461, %v1454
    %v1472 = vunpack.c.l.b16 %v1295
    %v1473 = vunpack.c.l.b16 %v1296
    %v1474 = vunpack.c.l.b16 %v1297
    %v1475 = vunpack.c.l.b16 %v1298
    %v1476 = vunpack.c.l.b16 %v1299
    %v1477 = vunpack.c.l.b16 %v1300
    %v1478 = vunpack.c.l.b16 %v1301
    %v1479 = vunpack.c.l.b16 %v1302
    %v1480 = vunpack.c.l.b16 %v1303
    %v1481 = vpack.c.b16 %v1473, %v1472
    %v1482 = vpack.c.b16 %v1475, %v1474
    %v1483 = vpack.c.b16 %v1477, %v1476
    %v1484 = vpack.c.b16 %v1479, %v1478
    %v1485 = vpack.c.b16 %v1480, %v1480
    %v1491 = vsel %vm1395, %v1462, 0
    %v1494 = vsel %vm1399, %v1485, 0
    %1496 = vmatprep.subr.bf16.mxu0 0
    %1497 = vmatpush1.bf16.msra.mxu0 %v1481
    %1498 = vmatprep.subr.bf16.mxu0 0
    %1499 = vmatpush1.bf16.msra.mxu0 %v1482
    %1500 = vmatprep.subr.bf16.mxu0 0
    %1501 = vmatpush1.bf16.msra.mxu0 %v1483
    %1502 = vmatprep.subr.bf16.mxu0 0
    %1503 = vmatpush1.bf16.msra.mxu0 %v1484
    %1504 = vmatprep.subr.bf16.mxu0 0
    %1505 = vmatpush1.bf16.msra.mxu0 %v1494
    %1506 = vmatprep.subr.bf16.mxu0 0
    %1507 = vmatpush1.bf16.msra.mxu0 0
    %1508 = vmatprep.subr.bf16.mxu0 0
    %1509 = vmatpush1.bf16.msra.mxu0 0
    %1510 = vmatprep.subr.bf16.mxu0 0
    %1511 = vmatpush1.bf16.msra.mxu0 0
    %1512 = vmatprep.subr.bf16.mxu0 0
    %1513 = vmatpush1.bf16.msra.mxu0 0
    %1514 = vmatprep.subr.bf16.mxu0 0
    %1515 = vmatpush1.bf16.msra.mxu0 0
    %1516 = vmatprep.subr.bf16.mxu0 0
    %1517 = vmatpush1.bf16.msra.mxu0 0
    %1518 = vmatprep.subr.bf16.mxu0 0
    %1519 = vmatpush1.bf16.msra.mxu0 0
    %1520 = vmatprep.subr.bf16.mxu0 0
    %1521 = vmatpush1.bf16.msra.mxu0 0
    %1522 = vmatprep.subr.bf16.mxu0 0
    %1523 = vmatpush1.bf16.msra.mxu0 0
    %1524 = vmatprep.subr.bf16.mxu0 0
    %1525 = vmatpush1.bf16.msra.mxu0 0
    %1526 = vmatprep.subr.bf16.mxu0 0
    %1527 = vmatpush1.bf16.msra.mxu0 0
    %1528 = vmatprep.mubr.bf16.mxu0 0
    %1529 = vmatmul.mubr.bf16.gmra.mrb[0].mxu0 %v1491
    %v1530 = vpop.f32.mrb[0].mxu0
    %v1531 = vadd.f32 %v1438, %v1530
    %v1532 = vpop.f32.mrb[0].mxu0
    %v1533 = vpop.f32.mrb[0].mxu0
    %v1534 = vadd.f32 %v1441, %v1533
    %v1535 = vpop.f32.mrb[0].mxu0
    %1536 = vdwg.mxu0
    %s1537 = scalar_lea.vmem %s3, 72
    %v1538 = vld [vmem:[%s1537] sm:$0xf]
    %v1539 = vld [vmem:[%s1537 + $0x4] sm:$0xf]
    %v1540 = vld [vmem:[%s1537 + $0x8] sm:$0xf]
    %v1541 = vld [vmem:[%s1537 + $0xc] sm:$0xf]
    %v1542 = vld [vmem:[%s1537 + $0x10] sm:$0xf]
    %v1543 = vld [vmem:[%s1537 + $0x14] sm:$0xf]
    %v1544 = vld [vmem:[%s1537 + $0x18] sm:$0xf]
    %v1545 = vld [vmem:[%s1537 + $0x1c] sm:$0xf]
    %v1546 = vld [vmem:[%s1537 + $0x20] sm:$0xf]
    %v1549 = vunpack.c.l.b16 %v1280
    %v1550 = vunpack.c.l.b16 %v1292
    %v1551 = vsel %vm1346, %v1332, %v1331
    %v1552 = vsel %vm1348, %v1333, %v1551
    %v1553 = vsel %vm1350, %v1334, %v1552
    %v1554 = vsel %vm1352, %v1335, %v1553
    %v1555 = vsel %vm1354, %v1336, %v1554
    %v1556 = vsel %vm1356, %v1337, %v1555
    %v1557 = vsel %vm1358, %v1549, %v1556
    %v1558 = vsel %vm1346, %v1340, %v1339
    %v1559 = vsel %vm1348, %v1341, %v1558
    %v1560 = vsel %vm1350, %v1342, %v1559
    %v1561 = vsel %vm1352, %v1343, %v1560
    %v1562 = vsel %vm1354, %v1344, %v1561
    %v1563 = vsel %vm1356, %v1345, %v1562
    %v1564 = vsel %vm1358, %v1550, %v1563
    %v1565 = vpack.c.b16 %v1564, %v1557
    %v1575 = vunpack.c.l.b16 %v1538
    %v1576 = vunpack.c.l.b16 %v1539
    %v1577 = vunpack.c.l.b16 %v1540
    %v1578 = vunpack.c.l.b16 %v1541
    %v1579 = vunpack.c.l.b16 %v1542
    %v1580 = vunpack.c.l.b16 %v1543
    %v1581 = vunpack.c.l.b16 %v1544
    %v1582 = vunpack.c.l.b16 %v1545
    %v1583 = vunpack.c.l.b16 %v1546
    %v1584 = vpack.c.b16 %v1576, %v1575
    %v1585 = vpack.c.b16 %v1578, %v1577
    %v1586 = vpack.c.b16 %v1580, %v1579
    %v1587 = vpack.c.b16 %v1582, %v1581
    %v1588 = vpack.c.b16 %v1583, %v1583
    %v1594 = vsel %vm1395, %v1565, 0
    %v1597 = vsel %vm1399, %v1588, 0
    %1599 = vmatprep.subr.bf16.mxu0 0
    %1600 = vmatpush1.bf16.msra.mxu0 %v1584
    %1601 = vmatprep.subr.bf16.mxu0 0
    %1602 = vmatpush1.bf16.msra.mxu0 %v1585
    %1603 = vmatprep.subr.bf16.mxu0 0
    %1604 = vmatpush1.bf16.msra.mxu0 %v1586
    %1605 = vmatprep.subr.bf16.mxu0 0
    %1606 = vmatpush1.bf16.msra.mxu0 %v1587
    %1607 = vmatprep.subr.bf16.mxu0 0
    %1608 = vmatpush1.bf16.msra.mxu0 %v1597
    %1609 = vmatprep.subr.bf16.mxu0 0
    %1610 = vmatpush1.bf16.msra.mxu0 0
    %1611 = vmatprep.subr.bf16.mxu0 0
    %1612 = vmatpush1.bf16.msra.mxu0 0
    %1613 = vmatprep.subr.bf16.mxu0 0
    %1614 = vmatpush1.bf16.msra.mxu0 0
    %1615 = vmatprep.subr.bf16.mxu0 0
    %1616 = vmatpush1.bf16.msra.mxu0 0
    %1617 = vmatprep.subr.bf16.mxu0 0
    %1618 = vmatpush1.bf16.msra.mxu0 0
    %1619 = vmatprep.subr.bf16.mxu0 0
    %1620 = vmatpush1.bf16.msra.mxu0 0
    %1621 = vmatprep.subr.bf16.mxu0 0
    %1622 = vmatpush1.bf16.msra.mxu0 0
    %1623 = vmatprep.subr.bf16.mxu0 0
    %1624 = vmatpush1.bf16.msra.mxu0 0
    %1625 = vmatprep.subr.bf16.mxu0 0
    %1626 = vmatpush1.bf16.msra.mxu0 0
    %1627 = vmatprep.subr.bf16.mxu0 0
    %1628 = vmatpush1.bf16.msra.mxu0 0
    %1629 = vmatprep.subr.bf16.mxu0 0
    %1630 = vmatpush1.bf16.msra.mxu0 0
    %1631 = vmatprep.mubr.bf16.mxu0 0
    %1632 = vmatmul.mubr.bf16.gmra.mrb[0].mxu0 %v1594
    %v1633 = vpop.f32.mrb[0].mxu0
    %v1634 = vadd.f32 0.0, %v1633
    %v1635 = vpop.f32.mrb[0].mxu0
    %v1636 = vpop.f32.mrb[0].mxu0
    %v1637 = vadd.f32 0.0, %v1636
    %v1638 = vpop.f32.mrb[0].mxu0
    %1639 = vdwg.mxu0
    %v1640 = vadd.f32 %v1531, %v1634
    %v1641 = vadd.f32 %v1534, %v1637
    %s1642 = scalar_lea.vmem %s3, 108
    %v1643 = vld [vmem:[%s1642] sm:$0xf]
    %v1644 = vld [vmem:[%s1642 + $0x4] sm:$0xf]
    %v1645 = vld [vmem:[%s1642 + $0x8] sm:$0xf]
    %v1646 = vld [vmem:[%s1642 + $0xc] sm:$0xf]
    %v1647 = vld [vmem:[%s1642 + $0x10] sm:$0xf]
    %v1648 = vld [vmem:[%s1642 + $0x14] sm:$0xf]
    %v1649 = vld [vmem:[%s1642 + $0x18] sm:$0xf]
    %v1650 = vld [vmem:[%s1642 + $0x1c] sm:$0xf]
    %v1651 = vld [vmem:[%s1642 + $0x20] sm:$0xf]
    %v1654 = vunpack.c.l.b16 %v1281
    %v1655 = vunpack.c.l.b16 %v1293
    %v1656 = vsel %vm1346, %v1333, %v1332
    %v1657 = vsel %vm1348, %v1334, %v1656
    %v1658 = vsel %vm1350, %v1335, %v1657
    %v1659 = vsel %vm1352, %v1336, %v1658
    %v1660 = vsel %vm1354, %v1337, %v1659
    %v1661 = vsel %vm1356, %v1549, %v1660
    %v1662 = vsel %vm1358, %v1654, %v1661
    %v1663 = vsel %vm1346, %v1341, %v1340
    %v1664 = vsel %vm1348, %v1342, %v1663
    %v1665 = vsel %vm1350, %v1343, %v1664
    %v1666 = vsel %vm1352, %v1344, %v1665
    %v1667 = vsel %vm1354, %v1345, %v1666
    %v1668 = vsel %vm1356, %v1550, %v1667
    %v1669 = vsel %vm1358, %v1655, %v1668
    %v1670 = vpack.c.b16 %v1669, %v1662
    %v1680 = vunpack.c.l.b16 %v1643
    %v1681 = vunpack.c.l.b16 %v1644
    %v1682 = vunpack.c.l.b16 %v1645
    %v1683 = vunpack.c.l.b16 %v1646
    %v1684 = vunpack.c.l.b16 %v1647
    %v1685 = vunpack.c.l.b16 %v1648
    %v1686 = vunpack.c.l.b16 %v1649
    %v1687 = vunpack.c.l.b16 %v1650
    %v1688 = vunpack.c.l.b16 %v1651
    %v1689 = vpack.c.b16 %v1681, %v1680
    %v1690 = vpack.c.b16 %v1683, %v1682
    %v1691 = vpack.c.b16 %v1685, %v1684
    %v1692 = vpack.c.b16 %v1687, %v1686
    %v1693 = vpack.c.b16 %v1688, %v1688
    %v1699 = vsel %vm1395, %v1670, 0
    %v1702 = vsel %vm1399, %v1693, 0
    %1704 = vmatprep.subr.bf16.mxu0 0
    %1705 = vmatpush1.bf16.msra.mxu0 %v1689
    %1706 = vmatprep.subr.bf16.mxu0 0
    %1707 = vmatpush1.bf16.msra.mxu0 %v1690
    %1708 = vmatprep.subr.bf16.mxu0 0
    %1709 = vmatpush1.bf16.msra.mxu0 %v1691
    %1710 = vmatprep.subr.bf16.mxu0 0
    %1711 = vmatpush1.bf16.msra.mxu0 %v1692
    %1712 = vmatprep.subr.bf16.mxu0 0
    %1713 = vmatpush1.bf16.msra.mxu0 %v1702
    %1714 = vmatprep.subr.bf16.mxu0 0
    %1715 = vmatpush1.bf16.msra.mxu0 0
    %1716 = vmatprep.subr.bf16.mxu0 0
    %1717 = vmatpush1.bf16.msra.mxu0 0
    %1718 = vmatprep.subr.bf16.mxu0 0
    %1719 = vmatpush1.bf16.msra.mxu0 0
    %1720 = vmatprep.subr.bf16.mxu0 0
    %1721 = vmatpush1.bf16.msra.mxu0 0
    %1722 = vmatprep.subr.bf16.mxu0 0
    %1723 = vmatpush1.bf16.msra.mxu0 0
    %1724 = vmatprep.subr.bf16.mxu0 0
    %1725 = vmatpush1.bf16.msra.mxu0 0
    %1726 = vmatprep.subr.bf16.mxu0 0
    %1727 = vmatpush1.bf16.msra.mxu0 0
    %1728 = vmatprep.subr.bf16.mxu0 0
    %1729 = vmatpush1.bf16.msra.mxu0 0
    %1730 = vmatprep.subr.bf16.mxu0 0
    %1731 = vmatpush1.bf16.msra.mxu0 0
    %1732 = vmatprep.subr.bf16.mxu0 0
    %1733 = vmatpush1.bf16.msra.mxu0 0
    %1734 = vmatprep.subr.bf16.mxu0 0
    %1735 = vmatpush1.bf16.msra.mxu0 0
    %1736 = vmatprep.mubr.bf16.mxu0 0
    %1737 = vmatmul.mubr.bf16.gmra.mrb[0].mxu0 %v1699
    %v1738 = vpop.f32.mrb[0].mxu0
    %v1739 = vadd.f32 0.0, %v1738
    %v1740 = vpop.f32.mrb[0].mxu0
    %v1741 = vpop.f32.mrb[0].mxu0
    %v1742 = vadd.f32 0.0, %v1741
    %v1743 = vpop.f32.mrb[0].mxu0
    %1744 = vdwg.mxu0
    %v1745 = vadd.f32 %v1640, %v1739
    %v1746 = vadd.f32 %v1641, %v1742
    %s1747 = scalar_lea.vmem %s3, 144
    %v1748 = vld [vmem:[%s1747] sm:$0xf]
    %v1749 = vld [vmem:[%s1747 + $0x4] sm:$0xf]
    %v1750 = vld [vmem:[%s1747 + $0x8] sm:$0xf]
    %v1751 = vld [vmem:[%s1747 + $0xc] sm:$0xf]
    %v1752 = vld [vmem:[%s1747 + $0x10] sm:$0xf]
    %v1753 = vld [vmem:[%s1747 + $0x14] sm:$0xf]
    %v1754 = vld [vmem:[%s1747 + $0x18] sm:$0xf]
    %v1755 = vld [vmem:[%s1747 + $0x1c] sm:$0xf]
    %v1756 = vld [vmem:[%s1747 + $0x20] sm:$0xf]
    %v1759 = vunpack.c.l.b16 %v1282
    %v1760 = vunpack.c.l.b16 %v1294
    %v1761 = vsel %vm1346, %v1334, %v1333
    %v1762 = vsel %vm1348, %v1335, %v1761
    %v1763 = vsel %vm1350, %v1336, %v1762
    %v1764 = vsel %vm1352, %v1337, %v1763
    %v1765 = vsel %vm1354, %v1549, %v1764
    %v1766 = vsel %vm1356, %v1654, %v1765
    %v1767 = vsel %vm1358, %v1759, %v1766
    %v1768 = vsel %vm1346, %v1342, %v1341
    %v1769 = vsel %vm1348, %v1343, %v1768
    %v1770 = vsel %vm1350, %v1344, %v1769
    %v1771 = vsel %vm1352, %v1345, %v1770
    %v1772 = vsel %vm1354, %v1550, %v1771
    %v1773 = vsel %vm1356, %v1655, %v1772
    %v1774 = vsel %vm1358, %v1760, %v1773
    %v1775 = vpack.c.b16 %v1774, %v1767
    %v1785 = vunpack.c.l.b16 %v1748
    %v1786 = vunpack.c.l.b16 %v1749
    %v1787 = vunpack.c.l.b16 %v1750
    %v1788 = vunpack.c.l.b16 %v1751
    %v1789 = vunpack.c.l.b16 %v1752
    %v1790 = vunpack.c.l.b16 %v1753
    %v1791 = vunpack.c.l.b16 %v1754
    %v1792 = vunpack.c.l.b16 %v1755
    %v1793 = vunpack.c.l.b16 %v1756
    %v1794 = vpack.c.b16 %v1786, %v1785
    %v1795 = vpack.c.b16 %v1788, %v1787
    %v1796 = vpack.c.b16 %v1790, %v1789
    %v1797 = vpack.c.b16 %v1792, %v1791
    %v1798 = vpack.c.b16 %v1793, %v1793
    %v1804 = vsel %vm1395, %v1775, 0
    %v1807 = vsel %vm1399, %v1798, 0
    %1809 = vmatprep.subr.bf16.mxu0 0
    %1810 = vmatpush1.bf16.msra.mxu0 %v1794
    %1811 = vmatprep.subr.bf16.mxu0 0
    %1812 = vmatpush1.bf16.msra.mxu0 %v1795
    %1813 = vmatprep.subr.bf16.mxu0 0
    %1814 = vmatpush1.bf16.msra.mxu0 %v1796
    %1815 = vmatprep.subr.bf16.mxu0 0
    %1816 = vmatpush1.bf16.msra.mxu0 %v1797
    %1817 = vmatprep.subr.bf16.mxu0 0
    %1818 = vmatpush1.bf16.msra.mxu0 %v1807
    %1819 = vmatprep.subr.bf16.mxu0 0
    %1820 = vmatpush1.bf16.msra.mxu0 0
    %1821 = vmatprep.subr.bf16.mxu0 0
    %1822 = vmatpush1.bf16.msra.mxu0 0
    %1823 = vmatprep.subr.bf16.mxu0 0
    %1824 = vmatpush1.bf16.msra.mxu0 0
    %1825 = vmatprep.subr.bf16.mxu0 0
    %1826 = vmatpush1.bf16.msra.mxu0 0
    %1827 = vmatprep.subr.bf16.mxu0 0
    %1828 = vmatpush1.bf16.msra.mxu0 0
    %1829 = vmatprep.subr.bf16.mxu0 0
    %1830 = vmatpush1.bf16.msra.mxu0 0
    %1831 = vmatprep.subr.bf16.mxu0 0
    %1832 = vmatpush1.bf16.msra.mxu0 0
    %1833 = vmatprep.subr.bf16.mxu0 0
    %1834 = vmatpush1.bf16.msra.mxu0 0
    %1835 = vmatprep.subr.bf16.mxu0 0
    %1836 = vmatpush1.bf16.msra.mxu0 0
    %1837 = vmatprep.subr.bf16.mxu0 0
    %1838 = vmatpush1.bf16.msra.mxu0 0
    %1839 = vmatprep.subr.bf16.mxu0 0
    %1840 = vmatpush1.bf16.msra.mxu0 0
    %1841 = vmatprep.mubr.bf16.mxu0 0
    %1842 = vmatmul.mubr.bf16.gmra.mrb[0].mxu0 %v1804
    %v1843 = vpop.f32.mrb[0].mxu0
    %v1844 = vadd.f32 0.0, %v1843
    %v1845 = vpop.f32.mrb[0].mxu0
    %v1846 = vpop.f32.mrb[0].mxu0
    %v1847 = vadd.f32 0.0, %v1846
    %v1848 = vpop.f32.mrb[0].mxu0
    %1849 = vdwg.mxu0
    %v1850 = vadd.f32 %v1745, %v1844
    %v1851 = vadd.f32 %v1746, %v1847
    %v1852 = vld [vmem:[#allocation5] sm:$0x1]
    %v1854 = vlaneseq
    %v1855 = vshrl.u32 %v1854, 7
    %v1856 = vsub.s32 0, %v1855
    %v1857 = vrot.slane %v1852, %v1856
    %v1859 = vadd.f32 %v1850, %v1857
    %v1860 = vadd.f32 %v1851, %v1857
    %v1861 = vmax.f32 %v1859, 0.0
    %v1862 = vmax.f32 %v1860, 0.0
    %1865 = vrot.lane.b32.xlu0 %v1861, 64
    %v1866 = vpop.permute.xlu0 %1865
    %1867 = vrot.lane.b32.xlu0 %v1862, 64
    %v1868 = vpop.permute.xlu0 %1867
    %v1871 = vmax.f32 %v1861, %v1866
    %v1872 = vmax.f32 %v1862, %v1868
    %v1875 = vcombine.high %v1871, %v1871
    %v1877 = vunpack.c.l.s4 1983009808
    %v1878 = vunpack.c.0.s8 %v1877
    %v1879 = vlaneseq
    %v1880 = vshrl.u32 %v1879, 7
    %v1881 = vsub.s32 %v1878, %v1880
    %v1882 = vrot.slane %v1871, %v1881
    %v1884 = vunpack.c.l.s4 1983009808
    %v1885 = vunpack.c.0.s8 %v1884
    %v1886 = vlaneseq
    %v1887 = vshrl.u32 %v1886, 7
    %v1888 = vsub.s32 %v1885, %v1887
    %v1889 = vrot.slane %v1875, %v1888
    %v1890 = vcombine.high %v1882, %v1882
    %v1891 = vcombine.high %v1889, %v1889
    %v1892 = vcombine.high %v1872, %v1872
    %v1894 = vunpack.c.l.s4 1983009808
    %v1895 = vunpack.c.0.s8 %v1894
    %v1896 = vlaneseq
    %v1897 = vshrl.u32 %v1896, 7
    %v1898 = vsub.s32 %v1895, %v1897
    %v1899 = vrot.slane %v1872, %v1898
    %v1901 = vunpack.c.l.s4 1983009808
    %v1902 = vunpack.c.0.s8 %v1901
    %v1903 = vlaneseq
    %v1904 = vshrl.u32 %v1903, 7
    %v1905 = vsub.s32 %v1902, %v1904
    %v1906 = vrot.slane %v1892, %v1905
    %v1907 = vcombine.high %v1899, %v1899
    %v1908 = vcombine.high %v1906, %v1906
    %vm1917 = vcmask 517120
    %v1918 = vsel %vm1917, %v1882, -inf
    %v1919 = vrot.slane %v1918, 4
    %v1920 = vmax.f32 %v1918, %v1919
    %v1921 = vrot.slane %v1920, 2
    %v1922 = vmax.f32 %v1920, %v1921
    %v1923 = vrot.slane %v1922, 1
    %v1924 = vmax.f32 %v1922, %v1923
    %v1925 = vsel %vm1917, %v1890, -inf
    %v1926 = vrot.slane %v1925, 4
    %v1927 = vmax.f32 %v1925, %v1926
    %v1928 = vrot.slane %v1927, 2
    %v1929 = vmax.f32 %v1927, %v1928
    %v1930 = vrot.slane %v1929, 1
    %v1931 = vmax.f32 %v1929, %v1930
    %v1932 = vsel %vm1917, %v1889, -inf
    %v1933 = vrot.slane %v1932, 4
    %v1934 = vmax.f32 %v1932, %v1933
    %v1935 = vrot.slane %v1934, 2
    %v1936 = vmax.f32 %v1934, %v1935
    %v1937 = vrot.slane %v1936, 1
    %v1938 = vmax.f32 %v1936, %v1937
    %v1939 = vsel %vm1917, %v1891, -inf
    %v1940 = vrot.slane %v1939, 4
    %v1941 = vmax.f32 %v1939, %v1940
    %v1942 = vrot.slane %v1941, 2
    %v1943 = vmax.f32 %v1941, %v1942
    %v1944 = vrot.slane %v1943, 1
    %v1945 = vmax.f32 %v1943, %v1944
    %v1946 = vsel %vm1917, %v1899, -inf
    %v1947 = vrot.slane %v1946, 4
    %v1948 = vmax.f32 %v1946, %v1947
    %v1949 = vrot.slane %v1948, 2
    %v1950 = vmax.f32 %v1948, %v1949
    %v1951 = vrot.slane %v1950, 1
    %v1952 = vmax.f32 %v1950, %v1951
    %v1953 = vsel %vm1917, %v1907, -inf
    %v1954 = vrot.slane %v1953, 4
    %v1955 = vmax.f32 %v1953, %v1954
    %v1956 = vrot.slane %v1955, 2
    %v1957 = vmax.f32 %v1955, %v1956
    %v1958 = vrot.slane %v1957, 1
    %v1959 = vmax.f32 %v1957, %v1958
    %v1960 = vsel %vm1917, %v1906, -inf
    %v1961 = vrot.slane %v1960, 4
    %v1962 = vmax.f32 %v1960, %v1961
    %v1963 = vrot.slane %v1962, 2
    %v1964 = vmax.f32 %v1962, %v1963
    %v1965 = vrot.slane %v1964, 1
    %v1966 = vmax.f32 %v1964, %v1965
    %v1967 = vsel %vm1917, %v1908, -inf
    %v1968 = vrot.slane %v1967, 4
    %v1969 = vmax.f32 %v1967, %v1968
    %v1970 = vrot.slane %v1969, 2
    %v1971 = vmax.f32 %v1969, %v1970
    %v1972 = vrot.slane %v1971, 1
    %v1973 = vmax.f32 %v1971, %v1972
    %v1974 = vpack.c.bf16 %v1924, %v1924
    %v1975 = vpack.c.bf16 %v1931, %v1931
    %v1976 = vpack.c.bf16 %v1938, %v1938
    %v1977 = vpack.c.bf16 %v1945, %v1945
    %v1978 = vpack.c.bf16 %v1952, %v1952
    %v1979 = vpack.c.bf16 %v1959, %v1959
    %v1980 = vpack.c.bf16 %v1966, %v1966
    %v1981 = vpack.c.bf16 %v1973, %v1973
    %v1990 = vunpack.c.l.b16 %v1974
    %v1991 = vunpack.c.l.b16 %v1975
    %v1992 = vunpack.c.l.b16 %v1976
    %v1993 = vunpack.c.l.b16 %v1977
    %v1994 = vunpack.c.l.b16 %v1978
    %v1995 = vunpack.c.l.b16 %v1979
    %v1996 = vunpack.c.l.b16 %v1980
    %v1997 = vunpack.c.l.b16 %v1981
    %v1998 = vsel %vm1346, %v1991, %v1990
    %v1999 = vsel %vm1348, %v1992, %v1998
    %v2000 = vsel %vm1350, %v1993, %v1999
    %v2001 = vsel %vm1346, %v1995, %v1994
    %v2002 = vsel %vm1348, %v1996, %v2001
    %v2003 = vsel %vm1350, %v1997, %v2002
    %v2004 = vpack.c.b16 %v2000, %v2000
    %v2005 = vpack.c.b16 %v2003, %v2003
    %v2008 = vunpack.c.l.s4 1934713408
    %v2009 = vunpack.c.0.s8 %v2008
    %v2010 = vlaneseq
    %v2011 = vshrl.u32 %v2010, 7
    %v2012 = vsub.s32 %v2009, %v2011
    %v2013 = vrot.slane %v2004, %v2012
    %v2014 = vcombine.high %v2013, 0
    %v2017 = vunpack.c.l.s4 1934713408
    %v2018 = vunpack.c.0.s8 %v2017
    %v2019 = vlaneseq
    %v2020 = vshrl.u32 %v2019, 7
    %v2021 = vsub.s32 %v2018, %v2020
    %v2022 = vrot.slane %v2005, %v2021
    %v2023 = vcombine.high %v2022, 0
    %v2026 = vpack.i.b16 %v2022, %v2013
    %v2027 = vshrl.u32 %v2013, 16
    %v2028 = vshrl.u32 %v2022, 16
    %v2029 = vpack.i.b16 %v2028, %v2027
    %v2032 = vpack.i.b16 %v2023, %v2014
    %v2033 = vshrl.u32 %v2014, 16
    %v2034 = vshrl.u32 %v2023, 16
    %v2035 = vpack.i.b16 %v2034, %v2033
    %2036 = vrot.lane.b32.xlu0 %v2029, 64
    %v2037 = vpop.permute.xlu0 %2036
    %2038 = vrot.lane.b32.xlu0 %v2035, 64
    %v2039 = vpop.permute.xlu0 %2038
    %vm2040 = vcmask 523264
    %v2043 = vsel %vm2040, %v2026, %v2037
    %v2047 = vsel %vm2040, %v2032, %v2039
    %v2049 = vld [vmem:[#allocation7] sm:$0xf]
    %v2050 = vld [vmem:[#allocation7 + $0x4] sm:$0xf]
    %v2051 = vld [vmem:[#allocation7 + $0x8] sm:$0xf]
    %v2052 = vld [vmem:[#allocation7 + $0xc] sm:$0xf]
    %v2053 = vld [vmem:[#allocation7 + $0x10] sm:$0xf]
    %v2054 = vld [vmem:[#allocation7 + $0x14] sm:$0xf]
    %v2055 = vld [vmem:[#allocation7 + $0x18] sm:$0xf]
    %v2056 = vld [vmem:[#allocation7 + $0x1c] sm:$0xf]
    %v2057 = vld [vmem:[#allocation7 + $0x20] sm:$0xf]
    %v2058 = vld [vmem:[#allocation7 + $0x24] sm:$0xf]
    %v2059 = vld [vmem:[#allocation7 + $0x28] sm:$0xf]
    %v2060 = vld [vmem:[#allocation7 + $0x2c] sm:$0xf]
    %v2061 = vld [vmem:[#allocation7 + $0x30] sm:$0xf]
    %v2062 = vld [vmem:[#allocation7 + $0x34] sm:$0xf]
    %v2063 = vld [vmem:[#allocation7 + $0x38] sm:$0xf]
    %v2064 = vld [vmem:[#allocation7 + $0x3c] sm:$0xf]
    %v2065 = vld [vmem:[#allocation7 + $0x40] sm:$0xf]
    %v2066 = vld [vmem:[#allocation7 + $0x44] sm:$0xf]
    %v2067 = vld [vmem:[#allocation7 + $0x48] sm:$0xf]
    %v2068 = vld [vmem:[#allocation7 + $0x4c] sm:$0xf]
    %v2069 = vld [vmem:[#allocation7 + $0x50] sm:$0xf]
    %v2070 = vld [vmem:[#allocation7 + $0x54] sm:$0xf]
    %v2071 = vld [vmem:[#allocation7 + $0x58] sm:$0xf]
    %v2072 = vld [vmem:[#allocation7 + $0x5c] sm:$0xf]
    %v2073 = vld [vmem:[#allocation7 + $0x60] sm:$0xf]
    %v2074 = vld [vmem:[#allocation7 + $0x64] sm:$0xf]
    %v2075 = vld [vmem:[#allocation7 + $0x68] sm:$0xf]
    %v2076 = vld [vmem:[#allocation7 + $0x6c] sm:$0xf]
    %v2077 = vld [vmem:[#allocation7 + $0x70] sm:$0xf]
    %v2078 = vld [vmem:[#allocation7 + $0x74] sm:$0xf]
    %v2079 = vld [vmem:[#allocation7 + $0x78] sm:$0xf]
    %v2080 = vld [vmem:[#allocation7 + $0x7c] sm:$0xf]
    %v2081 = vld [vmem:[#allocation8] sm:$0x1]
    %v2083 = vlaneseq
    %v2084 = vshrl.u32 %v2083, 7
    %v2085 = vsub.s32 0, %v2084
    %v2086 = vrot.slane %v2081, %v2085
    %v2120 = vunpack.c.l.b16 %v2049
    %v2121 = vunpack.c.l.b16 %v2050
    %v2122 = vunpack.c.l.b16 %v2051
    %v2123 = vunpack.c.l.b16 %v2052
    %v2124 = vunpack.c.l.b16 %v2053
    %v2125 = vunpack.c.l.b16 %v2054
    %v2126 = vunpack.c.l.b16 %v2055
    %v2127 = vunpack.c.l.b16 %v2056
    %v2128 = vunpack.c.l.b16 %v2057
    %v2129 = vunpack.c.l.b16 %v2058
    %v2130 = vunpack.c.l.b16 %v2059
    %v2131 = vunpack.c.l.b16 %v2060
    %v2132 = vunpack.c.l.b16 %v2061
    %v2133 = vunpack.c.l.b16 %v2062
    %v2134 = vunpack.c.l.b16 %v2063
    %v2135 = vunpack.c.l.b16 %v2064
    %v2136 = vunpack.c.l.b16 %v2065
    %v2137 = vunpack.c.l.b16 %v2066
    %v2138 = vunpack.c.l.b16 %v2067
    %v2139 = vunpack.c.l.b16 %v2068
    %v2140 = vunpack.c.l.b16 %v2069
    %v2141 = vunpack.c.l.b16 %v2070
    %v2142 = vunpack.c.l.b16 %v2071
    %v2143 = vunpack.c.l.b16 %v2072
    %v2144 = vunpack.c.l.b16 %v2073
    %v2145 = vunpack.c.l.b16 %v2074
    %v2146 = vunpack.c.l.b16 %v2075
    %v2147 = vunpack.c.l.b16 %v2076
    %v2148 = vunpack.c.l.b16 %v2077
    %v2149 = vunpack.c.l.b16 %v2078
    %v2150 = vunpack.c.l.b16 %v2079
    %v2151 = vunpack.c.l.b16 %v2080
    %v2152 = vpack.c.b16 %v2121, %v2120
    %v2153 = vpack.c.b16 %v2123, %v2122
    %v2154 = vpack.c.b16 %v2125, %v2124
    %v2155 = vpack.c.b16 %v2127, %v2126
    %v2156 = vpack.c.b16 %v2129, %v2128
    %v2157 = vpack.c.b16 %v2131, %v2130
    %v2158 = vpack.c.b16 %v2133, %v2132
    %v2159 = vpack.c.b16 %v2135, %v2134
    %v2160 = vpack.c.b16 %v2137, %v2136
    %v2161 = vpack.c.b16 %v2139, %v2138
    %v2162 = vpack.c.b16 %v2141, %v2140
    %v2163 = vpack.c.b16 %v2143, %v2142
    %v2164 = vpack.c.b16 %v2145, %v2144
    %v2165 = vpack.c.b16 %v2147, %v2146
    %v2166 = vpack.c.b16 %v2149, %v2148
    %v2167 = vpack.c.b16 %v2151, %v2150
    %2184 = vmatprep.subr.bf16.mxu0 0
    %2185 = vmatpush1.bf16.msra.mxu0 %v2152
    %2186 = vmatprep.subr.bf16.mxu0 0
    %2187 = vmatpush1.bf16.msra.mxu0 %v2153
    %2188 = vmatprep.subr.bf16.mxu0 0
    %2189 = vmatpush1.bf16.msra.mxu0 %v2154
    %2190 = vmatprep.subr.bf16.mxu0 0
    %2191 = vmatpush1.bf16.msra.mxu0 %v2155
    %2192 = vmatprep.subr.bf16.mxu0 0
    %2193 = vmatpush1.bf16.msra.mxu0 %v2156
    %2194 = vmatprep.subr.bf16.mxu0 0
    %2195 = vmatpush1.bf16.msra.mxu0 %v2157
    %2196 = vmatprep.subr.bf16.mxu0 0
    %2197 = vmatpush1.bf16.msra.mxu0 %v2158
    %2198 = vmatprep.subr.bf16.mxu0 0
    %2199 = vmatpush1.bf16.msra.mxu0 %v2159
    %2200 = vmatprep.subr.bf16.mxu0 0
    %2201 = vmatpush1.bf16.msra.mxu0 %v2160
    %2202 = vmatprep.subr.bf16.mxu0 0
    %2203 = vmatpush1.bf16.msra.mxu0 %v2161
    %2204 = vmatprep.subr.bf16.mxu0 0
    %2205 = vmatpush1.bf16.msra.mxu0 %v2162
    %2206 = vmatprep.subr.bf16.mxu0 0
    %2207 = vmatpush1.bf16.msra.mxu0 %v2163
    %2208 = vmatprep.subr.bf16.mxu0 0
    %2209 = vmatpush1.bf16.msra.mxu0 %v2164
    %2210 = vmatprep.subr.bf16.mxu0 0
    %2211 = vmatpush1.bf16.msra.mxu0 %v2165
    %2212 = vmatprep.subr.bf16.mxu0 0
    %2213 = vmatpush1.bf16.msra.mxu0 %v2166
    %2214 = vmatprep.subr.bf16.mxu0 0
    %2215 = vmatpush1.bf16.msra.mxu0 %v2167
    %2216 = vmatprep.mubr.bf16.mxu0 %v2047
    %2217 = vmatmul.mubr.bf16.gmra.mrb[0].mxu0 %v2043
    %v2218 = vpop.f32.mrb[0].mxu0
    %v2219 = vadd.f32 %v2086, %v2218
    %v2220 = vpop.f32.mrb[0].mxu0
    %v2221 = vpop.f32.mrb[0].mxu0
    %v2222 = vpop.f32.mrb[0].mxu0
    %2223 = vdwg.mxu0
    %v2224 = vmax.f32 %v2219, 0.0
    %v2225 = vpack.c.bf16 %v2224, %v2224
    %v2226 = vld [vmem:[%s7] sm:$0xf]
    %v2227 = vld [vmem:[%s7 + $0x4] sm:$0xf]
    %v2228 = vld [vmem:[%s7 + $0x8] sm:$0xf]
    %v2229 = vld [vmem:[%s7 + $0xc] sm:$0xf]
    %v2230 = vld [vmem:[%s7 + $0x10] sm:$0xf]
    %v2231 = vld [vmem:[%s7 + $0x14] sm:$0xf]
    %v2232 = vld [vmem:[%s7 + $0x18] sm:$0xf]
    %v2233 = vld [vmem:[%s7 + $0x1c] sm:$0xf]
    %v2234 = vld [vmem:[%s7 + $0x20] sm:$0xf]
    %v2235 = vld [vmem:[%s7 + $0x24] sm:$0xf]
    %v2236 = vld [vmem:[%s7 + $0x28] sm:$0xf]
    %v2237 = vld [vmem:[%s7 + $0x2c] sm:$0xf]
    %v2238 = vld [vmem:[%s7 + $0x30] sm:$0xf]
    %v2239 = vld [vmem:[%s7 + $0x34] sm:$0xf]
    %v2240 = vld [vmem:[%s7 + $0x38] sm:$0xf]
    %v2241 = vld [vmem:[%s7 + $0x3c] sm:$0xf]
    %v2242 = vld [vmem:[#allocation10] sm:$0x1]
    %v2244 = vlaneseq
    %v2245 = vshrl.u32 %v2244, 7
    %v2246 = vsub.s32 0, %v2245
    %v2247 = vrot.slane %v2242, %v2246
    %v2265 = vunpack.c.l.b16 %v2226
    %v2266 = vunpack.c.l.b16 %v2227
    %v2267 = vunpack.c.l.b16 %v2228
    %v2268 = vunpack.c.l.b16 %v2229
    %v2269 = vunpack.c.l.b16 %v2230
    %v2270 = vunpack.c.l.b16 %v2231
    %v2271 = vunpack.c.l.b16 %v2232
    %v2272 = vunpack.c.l.b16 %v2233
    %v2273 = vunpack.c.l.b16 %v2234
    %v2274 = vunpack.c.l.b16 %v2235
    %v2275 = vunpack.c.l.b16 %v2236
    %v2276 = vunpack.c.l.b16 %v2237
    %v2277 = vunpack.c.l.b16 %v2238
    %v2278 = vunpack.c.l.b16 %v2239
    %v2279 = vunpack.c.l.b16 %v2240
    %v2280 = vunpack.c.l.b16 %v2241
    %v2281 = vpack.c.b16 %v2266, %v2265
    %v2282 = vpack.c.b16 %v2268, %v2267
    %v2283 = vpack.c.b16 %v2270, %v2269
    %v2284 = vpack.c.b16 %v2272, %v2271
    %v2285 = vpack.c.b16 %v2274, %v2273
    %v2286 = vpack.c.b16 %v2276, %v2275
    %v2287 = vpack.c.b16 %v2278, %v2277
    %v2288 = vpack.c.b16 %v2280, %v2279
    %2297 = vmatprep.subr.bf16.mxu0 0
    %2298 = vmatpush1.bf16.msra.mxu0 %v2281
    %2299 = vmatprep.subr.bf16.mxu0 0
    %2300 = vmatpush1.bf16.msra.mxu0 %v2282
    %2301 = vmatprep.subr.bf16.mxu0 0
    %2302 = vmatpush1.bf16.msra.mxu0 %v2283
    %2303 = vmatprep.subr.bf16.mxu0 0
    %2304 = vmatpush1.bf16.msra.mxu0 %v2284
    %2305 = vmatprep.subr.bf16.mxu0 0
    %2306 = vmatpush1.bf16.msra.mxu0 %v2285
    %2307 = vmatprep.subr.bf16.mxu0 0
    %2308 = vmatpush1.bf16.msra.mxu0 %v2286
    %2309 = vmatprep.subr.bf16.mxu0 0
    %2310 = vmatpush1.bf16.msra.mxu0 %v2287
    %2311 = vmatprep.subr.bf16.mxu0 0
    %2312 = vmatpush1.bf16.msra.mxu0 %v2288
    %2313 = vmatprep.subr.bf16.mxu0 0
    %2314 = vmatpush1.bf16.msra.mxu0 0
    %2315 = vmatprep.subr.bf16.mxu0 0
    %2316 = vmatpush1.bf16.msra.mxu0 0
    %2317 = vmatprep.subr.bf16.mxu0 0
    %2318 = vmatpush1.bf16.msra.mxu0 0
    %2319 = vmatprep.subr.bf16.mxu0 0
    %2320 = vmatpush1.bf16.msra.mxu0 0
    %2321 = vmatprep.subr.bf16.mxu0 0
    %2322 = vmatpush1.bf16.msra.mxu0 0
    %2323 = vmatprep.subr.bf16.mxu0 0
    %2324 = vmatpush1.bf16.msra.mxu0 0
    %2325 = vmatprep.subr.bf16.mxu0 0
    %2326 = vmatpush1.bf16.msra.mxu0 0
    %2327 = vmatprep.subr.bf16.mxu0 0
    %2328 = vmatpush1.bf16.msra.mxu0 0
    %2329 = vmatprep.mubr.bf16.mxu0 0
    %2330 = vmatmul.mubr.bf16.gmra.mrb[0].mxu0 %v2225
    %v2331 = vpop.f32.mrb[0].mxu0
    %v2332 = vadd.f32 %v2247, %v2331
    %v2333 = vpop.f32.mrb[0].mxu0
    %v2334 = vpop.f32.mrb[0].mxu0
    %v2335 = vpop.f32.mrb[0].mxu0
    %2336 = vdwg.mxu0
    %v2337 = vmax.f32 %v2332, 0.0
    %v2338 = vpack.c.bf16 %v2337, %v2337
    %v2339 = vld [vmem:[#allocation11] sm:$0xf]
    %v2340 = vld [vmem:[#allocation11 + $0x4] sm:$0xf]
    %v2341 = vld [vmem:[#allocation11 + $0x8] sm:$0xf]
    %v2342 = vld [vmem:[#allocation11 + $0xc] sm:$0xf]
    %v2343 = vld [vmem:[#allocation11 + $0x10] sm:$0xf]
    %v2344 = vld [vmem:[#allocation11 + $0x14] sm:$0xf]
    %v2345 = vld [vmem:[#allocation11 + $0x18] sm:$0xf]
    %v2346 = vld [vmem:[#allocation11 + $0x1c] sm:$0xf]
    %v2347 = vld [vmem:[%s10] sm:$0x1]
    %v2349 = vlaneseq
    %v2350 = vshrl.u32 %v2349, 7
    %v2351 = vsub.s32 0, %v2350
    %v2352 = vrot.slane %v2347, %v2351
    %v2362 = vunpack.c.l.b16 %v2339
    %v2363 = vunpack.c.l.b16 %v2340
    %v2364 = vunpack.c.l.b16 %v2341
    %v2365 = vunpack.c.l.b16 %v2342
    %v2366 = vunpack.c.l.b16 %v2343
    %v2367 = vunpack.c.l.b16 %v2344
    %v2368 = vunpack.c.l.b16 %v2345
    %v2369 = vunpack.c.l.b16 %v2346
    %v2370 = vpack.c.b16 %v2363, %v2362
    %v2371 = vpack.c.b16 %v2365, %v2364
    %v2372 = vpack.c.b16 %v2367, %v2366
    %v2373 = vpack.c.b16 %v2369, %v2368
    %v2379 = vsel %vm2040, %v2338, 0
    %2381 = vmatprep.subr.bf16.mxu0 0
    %2382 = vmatpush1.bf16.msra.mxu0 %v2370
    %2383 = vmatprep.subr.bf16.mxu0 0
    %2384 = vmatpush1.bf16.msra.mxu0 %v2371
    %2385 = vmatprep.subr.bf16.mxu0 0
    %2386 = vmatpush1.bf16.msra.mxu0 %v2372
    %2387 = vmatprep.subr.bf16.mxu0 0
    %2388 = vmatpush1.bf16.msra.mxu0 %v2373
    %2389 = vmatprep.subr.bf16.mxu0 0
    %2390 = vmatpush1.bf16.msra.mxu0 0
    %2391 = vmatprep.subr.bf16.mxu0 0
    %2392 = vmatpush1.bf16.msra.mxu0 0
    %2393 = vmatprep.subr.bf16.mxu0 0
    %2394 = vmatpush1.bf16.msra.mxu0 0
    %2395 = vmatprep.subr.bf16.mxu0 0
    %2396 = vmatpush1.bf16.msra.mxu0 0
    %2397 = vmatprep.subr.bf16.mxu0 0
    %2398 = vmatpush1.bf16.msra.mxu0 0
    %2399 = vmatprep.subr.bf16.mxu0 0
    %2400 = vmatpush1.bf16.msra.mxu0 0
    %2401 = vmatprep.subr.bf16.mxu0 0
    %2402 = vmatpush1.bf16.msra.mxu0 0
    %2403 = vmatprep.subr.bf16.mxu0 0
    %2404 = vmatpush1.bf16.msra.mxu0 0
    %2405 = vmatprep.subr.bf16.mxu0 0
    %2406 = vmatpush1.bf16.msra.mxu0 0
    %2407 = vmatprep.subr.bf16.mxu0 0
    %2408 = vmatpush1.bf16.msra.mxu0 0
    %2409 = vmatprep.subr.bf16.mxu0 0
    %2410 = vmatpush1.bf16.msra.mxu0 0
    %2411 = vmatprep.subr.bf16.mxu0 0
    %2412 = vmatpush1.bf16.msra.mxu0 0
    %2413 = vmatprep.mubr.bf16.mxu0 0
    %2414 = vmatmul.mubr.bf16.gmra.mrb[0].mxu0 %v2379
    %v2415 = vpop.f32.mrb[0].mxu0
    %v2416 = vadd.f32 %v2352, %v2415
    %v2417 = vpop.f32.mrb[0].mxu0
    %v2418 = vpop.f32.mrb[0].mxu0
    %v2419 = vpop.f32.mrb[0].mxu0
    %2420 = vdwg.mxu0
    %vm2421 = vcmp.ge.f32.partialorder %v2416, 0.0
    %v2422 = vsub.f32 0.0, %v2416
    %v2423 = vsel %vm2421, %v2422, %v2416
    %v2424 = vmul.f32 %v2423, 1.442695
    %v2425 = vpow.pop %v2424
    %v2426 = vadd.f32 %v2425, 1.0
    %v2427 = vrcp.pop %v2426
    %v2428 = vmul.f32 1.0, %v2427
    %v2429 = vmul.f32 %v2425, %v2427
    %v2430 = vsel %vm2421, %v2428, %v2429
    %2431 = vst [vmem:[#allocation13] sm:$0x3] %v2430
    // Predicated region
    $region70: #{conditional_conv_discriminator.1} parent=1 // pred_check
      _
    $region71: #{conditional_conv_discriminator.1} parent=1 // pred_check_branch
      %2433 = sbr.rel (0) target = $region73
    $region72: #{conditional_conv_discriminator.1} parent=1 // pred_region
      %s2435 = ssub.s32 32, 32
      %2436 = vsyncadd [#allocation4], %s2435
      %s2438 = sshll.u32 [#allocation13], 4
      %s2439 = int_to_ptr.vmem [resolvable:$true] %s2438
      %2441 = dma.vmem_to_hbm [thread:$0]  %s2439, 32, %s11, [#allocation4]
    $region73: #{conditional_conv_discriminator.1} parent=1 // pred_fallthru
      _
    // Predicated region
    $region74: #{conditional_conv_discriminator.1} parent=1 // pred_check
      _
    $region75: #{conditional_conv_discriminator.1} parent=1 // pred_check_branch
      %2443 = sbr.rel (0) target = $region77
    $region76: #{conditional_conv_discriminator.1} parent=1 // pred_region
      %2444 = dma.done [#allocation4], 32
    $region77: #{conditional_conv_discriminator.1} parent=1 // pred_fallthru
      _
    %2445 = vsyncpa [#allocation3], 1
    %2446 = vsyncpa [#allocation6], 1
    %2447 = vsyncpa [#allocation9], 1
    %2448 = vsyncpa [#allocation12], 1
    %2449 = vsyncpa [#allocation4], 1

</llo_original>
